<compile_context>
chip_gen: v7x
topology: tpu7x:2x2x1
jax: 0.10.0
libtpu: 0.0.40
codegen_flags: <defaults>
</compile_context>

<pallas_src>
import functools
import math

import jax
import jax.numpy as jnp
from jax import lax
from jax.experimental import pallas as pl
from jax.experimental.pallas import tpu as pltpu


# ----------------------------- tile selection -------------------------------

def _pick_tile(dim, target, align):
    """Largest tile <= target that is a multiple of `align` and divides `dim`.
    Falls back to the full dim (block == full array dim is always legal)."""
    if dim <= target:
        return dim
    t = (target // align) * align
    while t >= align:
        if dim % t == 0:
            return t
        t -= align
    return dim


def _round_up(x, m):
    return ((x + m - 1) // m) * m


# ------------------------- generic tiled linear ------------------------------

def _linear_kernel(x_ref, w_ref, b_ref, o_ref, acc_ref, *, relu):
    @pl.when(pl.program_id(2) == 0)
    def _():
        acc_ref[...] = jnp.zeros_like(acc_ref)

    # x and w are both bf16 already -> no per-k-step VALU cast.
    acc_ref[...] += jnp.dot(x_ref[...], w_ref[...],
                            preferred_element_type=jnp.float32)

    @pl.when(pl.program_id(2) == pl.num_programs(2) - 1)
    def _():
        y = acc_ref[...] + b_ref[...]          # f32 epilogue
        if relu:
            y = jnp.maximum(y, 0.0)
        o_ref[...] = y.astype(o_ref.dtype)


def linear(x, w, b, *, relu=False, tm=512, tn=512, tk=512):
    """x: (M, K) bf16, w: (K, N) bf16, b: (N,) f32 -> (M, N) f32.

    If N is not a multiple of 128, the weight/bias columns are zero-padded so the
    writeback is lane-dense (unmasked vst), and the result is sliced outside."""
    M, K = x.shape
    N = w.shape[1]
    N_pad = N if N % 128 == 0 else _round_up(N, 128)
    if N_pad != N:
        w = jnp.pad(w, ((0, 0), (0, N_pad - N)))
        b = jnp.pad(b, (0, N_pad - N))

    tm = _pick_tile(M, tm, 8)
    tn = _pick_tile(N_pad, tn, 128)
    tk = _pick_tile(K, tk, 128)
    grid = (M // tm, N_pad // tn, K // tk)

    out = pl.pallas_call(
        functools.partial(_linear_kernel, relu=relu),
        out_shape=jax.ShapeDtypeStruct((M, N_pad), jnp.float32),
        grid=grid,
        in_specs=[
            pl.BlockSpec((tm, tk), lambda i, j, k: (i, k)),
            pl.BlockSpec((tk, tn), lambda i, j, k: (k, j)),
            pl.BlockSpec((1, tn), lambda i, j, k: (0, j)),
        ],
        out_specs=pl.BlockSpec((tm, tn), lambda i, j, k: (i, j)),
        scratch_shapes=[pltpu.VMEM((tm, tn), jnp.float32)],
        compiler_params=pltpu.CompilerParams(
            dimension_semantics=("parallel", "parallel", "arbitrary")),
        cost_estimate=pl.CostEstimate(
            flops=2 * M * N_pad * K,
            transcendentals=0,
            bytes_accessed=2 * M * K + 2 * K * N_pad + 4 * M * N_pad + 4 * N_pad),
    )(x, w, b.reshape(1, N_pad))
    if N_pad != N:
        out = out[:, :N]
    return out


# ----------------- input projection + positional encoding --------------------

def _input_pe_kernel(x_ref, w_ref, b_ref, pe_ref, o_ref):
    x = x_ref[0].astype(jnp.bfloat16)                      # (S, in)
    y = jnp.dot(x, w_ref[...], preferred_element_type=jnp.float32)
    o_ref[0] = (y + b_ref[...] + pe_ref[...]).astype(o_ref.dtype)


def input_linear_pe(src, w, b, pe):
    """src: (B, S, in) f32 -> (B, S, D) bf16;  out = src @ w + b + pe[:S].
    Dropout = identity (eval)."""
    B, S, K = src.shape
    D = w.shape[1]
    return pl.pallas_call(
        _input_pe_kernel,
        out_shape=jax.ShapeDtypeStruct((B, S, D), jnp.bfloat16),
        grid=(B,),
        in_specs=[
            pl.BlockSpec((1, S, K), lambda b_: (b_, 0, 0)),
            pl.BlockSpec((K, D), lambda b_: (0, 0)),
            pl.BlockSpec((1, D), lambda b_: (0, 0)),
            pl.BlockSpec((S, D), lambda b_: (0, 0)),
        ],
        out_specs=pl.BlockSpec((1, S, D), lambda b_: (b_, 0, 0)),
        compiler_params=pltpu.CompilerParams(dimension_semantics=("parallel",)),
        cost_estimate=pl.CostEstimate(
            flops=2 * B * S * K * D,
            transcendentals=0,
            bytes_accessed=4 * B * S * K + 2 * B * S * D + 2 * K * D),
    )(src, w, b.reshape(1, D), pe[:S])


# -------- fully fused encoder layer: QKV + SDPA + out-proj + LN1 + FFN + LN2 --------

def _encoder_layer_kernel(x_ref, wqkv_ref, bqkv_ref, wo_ref, bo_ref,
                          g1_ref, bb1_ref, wf1_ref, bf1_ref, wf2_ref, bf2_ref,
                          g2_ref, bb2_ref, o_ref, *, nhead, eps):
    x = x_ref[0].astype(jnp.float32)                       # (S, d) f32 working copy
    S, d = x.shape
    hd = d // nhead
    scale = 1.0 / math.sqrt(hd)

    # ---- fused QKV in-projection: one wide (d, 3d) matmul on the MXU ----
    qkv = jnp.dot(x.astype(jnp.bfloat16), wqkv_ref[...],
                  preferred_element_type=jnp.float32) + bqkv_ref[...]   # (S, 3d)

    # ---- per-head SDPA; heads concatenated, then ONE K=d out-projection matmul ----
    heads = []
    for h in range(nhead):
        qh = qkv[:, h * hd:(h + 1) * hd].astype(jnp.bfloat16)
        kh = qkv[:, d + h * hd:d + (h + 1) * hd].astype(jnp.bfloat16)
        vh = qkv[:, 2 * d + h * hd:2 * d + (h + 1) * hd].astype(jnp.bfloat16)
        # q @ k^T without materializing a transpose.
        s = lax.dot_general(qh, kh, (((1,), (1,)), ((), ())),
                            preferred_element_type=jnp.float32) * scale  # (S, S)
        m = jnp.max(s, axis=-1, keepdims=True)
        p = jnp.exp(s - m)
        p = p * pl.reciprocal(jnp.sum(p, axis=-1, keepdims=True), approx=True)
        oh = jnp.dot(p.astype(jnp.bfloat16), vh,
                     preferred_element_type=jnp.float32)                 # (S, hd)
        heads.append(oh)
    concat = jnp.concatenate(heads, axis=-1).astype(jnp.bfloat16)        # (S, d)
    attn = jnp.dot(concat, wo_ref[...],
                   preferred_element_type=jnp.float32) + bo_ref[...]     # (S, d)

    # ---- residual + LayerNorm1 (post-norm, PyTorch default) ----
    y = x + attn
    mu = jnp.mean(y, axis=-1, keepdims=True)
    var = jnp.mean((y - mu) * (y - mu), axis=-1, keepdims=True)
    x1 = (y - mu) * lax.rsqrt(var + eps) * g1_ref[...] + bb1_ref[...]    # (S, d) f32

    # ---- FFN: linear1 + ReLU + linear2; hidden never leaves VMEM ----
    h1 = jnp.dot(x1.astype(jnp.bfloat16), wf1_ref[...],
                 preferred_element_type=jnp.float32) + bf1_ref[...]
    h1 = jnp.maximum(h1, 0.0)
    y2 = jnp.dot(h1.astype(jnp.bfloat16), wf2_ref[...],
                 preferred_element_type=jnp.float32) + bf2_ref[...]

    # ---- residual + LayerNorm2 ----
    y2 = x1 + y2
    mu2 = jnp.mean(y2, axis=-1, keepdims=True)
    var2 = jnp.mean((y2 - mu2) * (y2 - mu2), axis=-1, keepdims=True)
    o_ref[0] = ((y2 - mu2) * lax.rsqrt(var2 + eps) * g2_ref[...]
                + bb2_ref[...]).astype(o_ref.dtype)


def encoder_layer(x, p, nhead):
    """One PyTorch TransformerEncoderLayer (post-norm, relu FFN), eval mode.
    x: (B, S, d) bf16 -> (B, S, d) bf16."""
    B, S, d = x.shape
    dff = p["Wf1"].shape[1]
    return pl.pallas_call(
        functools.partial(_encoder_layer_kernel, nhead=nhead, eps=1e-5),
        out_shape=jax.ShapeDtypeStruct((B, S, d), jnp.bfloat16),
        grid=(B,),
        in_specs=[
            pl.BlockSpec((1, S, d), lambda b_: (b_, 0, 0)),
            pl.BlockSpec((d, 3 * d), lambda b_: (0, 0)),
            pl.BlockSpec((1, 3 * d), lambda b_: (0, 0)),
            pl.BlockSpec((d, d), lambda b_: (0, 0)),
            pl.BlockSpec((1, d), lambda b_: (0, 0)),
            pl.BlockSpec((1, d), lambda b_: (0, 0)),
            pl.BlockSpec((1, d), lambda b_: (0, 0)),
            pl.BlockSpec((d, dff), lambda b_: (0, 0)),
            pl.BlockSpec((1, dff), lambda b_: (0, 0)),
            pl.BlockSpec((dff, d), lambda b_: (0, 0)),
            pl.BlockSpec((1, d), lambda b_: (0, 0)),
            pl.BlockSpec((1, d), lambda b_: (0, 0)),
            pl.BlockSpec((1, d), lambda b_: (0, 0)),
        ],
        out_specs=pl.BlockSpec((1, S, d), lambda b_: (b_, 0, 0)),
        compiler_params=pltpu.CompilerParams(dimension_semantics=("parallel",)),
        cost_estimate=pl.CostEstimate(
            flops=(2 * B * S * d * 3 * d            # QKV
                   + 4 * B * S * S * d              # QK^T + PV
                   + 2 * B * S * d * d              # out-proj
                   + 4 * B * S * d * dff),          # FFN
            transcendentals=B * nhead * S * S,
            bytes_accessed=(2 * 2 * B * S * d       # x in + out (bf16)
                            + 2 * (3 * d * d + d * d + 2 * d * dff))),
    )(x, p["Wqkv"], p["bqkv"].reshape(1, -1), p["Wo"], p["bo"].reshape(1, -1),
      p["ln1_g"].reshape(1, -1), p["ln1_b"].reshape(1, -1),
      p["Wf1"], p["bf1"].reshape(1, -1), p["Wf2"], p["bf2"].reshape(1, -1),
      p["ln2_g"].reshape(1, -1), p["ln2_b"].reshape(1, -1))


# ------------------------------ model pieces ---------------------------------

def make_positional_encoding(max_len, d_model):
    position = jnp.arange(max_len, dtype=jnp.float32)[:, None]
    div_term = jnp.exp(
        jnp.arange(0, d_model, 2, dtype=jnp.float32)
        * (-math.log(10000.0) / d_model))
    pe = jnp.zeros((max_len, d_model), dtype=jnp.float32)
    pe = pe.at[:, 0::2].set(jnp.sin(position * div_term))
    pe = pe.at[:, 1::2].set(jnp.cos(position * div_term))  # d_model even here
    return pe


def transformer_forward(params, src, nhead):
    """src: (B, S, input_size) -> (B, S, output_size).
    The transpose(0,1) round-trip of the PyTorch module is folded into the
    batch-first layout (self-attention only mixes along the sequence axis)."""
    B, S, _ = src.shape
    d = params["W_in"].shape[1]

    # input_linear + positional encoding (dropout = identity in eval); bf16 activations
    x = input_linear_pe(src, params["W_in"], params["b_in"], params["pe"])

    # N fully fused encoder layers
    for lp in params["layers"]:
        x = encoder_layer(x, lp, nhead)

    # decoder (lane-dense padded matmul), f32 output
    out = linear(x.reshape(B * S, d), params["W_dec"], params["b_dec"])
    return out.reshape(B, S, -1)


# --------------------------- deterministic init ------------------------------

def init_params(key, input_size, output_size, num_layers, d_model, d_ff=None,
                max_len=128):
    d_ff = d_model if d_ff is None else d_ff   # module uses d_ff == d_model

    def dense(k, shape):
        return jax.random.normal(k, shape, dtype=jnp.float32) * 0.02

    keys = jax.random.split(key, 2 + num_layers)
    params = {
        "W_in": dense(keys[0], (input_size, d_model)).astype(jnp.bfloat16),
        "b_in": jnp.zeros((d_model,), jnp.float32),
        "W_dec": dense(keys[1], (d_model, output_size)).astype(jnp.bfloat16),
        "b_dec": jnp.zeros((output_size,), jnp.float32),
        "pe": make_positional_encoding(max_len, d_model),
        "layers": [],
    }
    for li in range(num_layers):
        lk = jax.random.split(keys[2 + li], 6)
        Wq = dense(lk[0], (d_model, d_model))
        Wk = dense(lk[1], (d_model, d_model))
        Wv = dense(lk[2], (d_model, d_model))
        params["layers"].append({
            # fused QKV in-projection; matmul weights stored in bf16 for the MXU
            "Wqkv": jnp.concatenate([Wq, Wk, Wv], axis=1).astype(jnp.bfloat16),
            "bqkv": jnp.zeros((3 * d_model,), jnp.float32),
            "Wo": dense(lk[3], (d_model, d_model)).astype(jnp.bfloat16),
            "bo": jnp.zeros((d_model,), jnp.float32),
            "ln1_g": jnp.ones((d_model,), jnp.float32),
            "ln1_b": jnp.zeros((d_model,), jnp.float32),
            "Wf1": dense(lk[4], (d_model, d_ff)).astype(jnp.bfloat16),
            "bf1": jnp.zeros((d_ff,), jnp.float32),
            "Wf2": dense(lk[5], (d_ff, d_model)).astype(jnp.bfloat16),
            "bf2": jnp.zeros((d_model,), jnp.float32),
            "ln2_g": jnp.ones((d_model,), jnp.float32),
            "ln2_b": jnp.zeros((d_model,), jnp.float32),
        })
    return params


# ----------------------------------- main ------------------------------------

if __name__ == "__main__":
    # Small, module-consistent shapes.
    B, S = 2, 8
    input_size = 16
    output_size = 8
    num_layers = 2
    nhead = 4
    dim_feedforward = 32  # d_model of this module (FFN hidden == d_model per spec)

    key = jax.random.PRNGKey(0)
    pkey, xkey = jax.random.split(key)
    params = init_params(pkey, input_size, output_size, num_layers, dim_feedforward)

    src = jax.random.normal(xkey, (B, S, input_size), dtype=jnp.float32)

    fwd = jax.jit(functools.partial(transformer_forward, nhead=nhead))
    out = fwd(params, src)
    out = jax.block_until_ready(out)

    assert out.shape == (B, S, output_size)
    assert bool(jnp.all(jnp.isfinite(out)))
    print("KERNEL_OK")
</pallas_src>

<mosaic_0001>
module attributes {stable_mosaic.version = 11 : i64} {
  func.func @_input_pe_kernel(%arg0: i32, %arg1: memref<1x8x16xf32, #tpu.memory_space<vmem>>, %arg2: memref<16x32xbf16, #tpu.memory_space<vmem>>, %arg3: memref<1x32xf32, #tpu.memory_space<vmem>>, %arg4: memref<8x32xf32, #tpu.memory_space<vmem>>, %arg5: memref<1x8x32xbf16, #tpu.memory_space<vmem>>) attributes {dimension_semantics = [#tpu.dimension_semantics<parallel>], iteration_bounds = array<i64: 2>, scalar_prefetch = 0 : i64, scratch_operands = 0 : i64, tpu.core_type = #tpu.core_type<tc>, window_params = [{transform_indices = @transform_0, window_bounds = array<i64: 1, 8, 16>}, {pipeline_mode = #tpu.pipeline_mode<synchronous>, transform_indices = @transform_1, window_bounds = array<i64: 16, 32>}, {pipeline_mode = #tpu.pipeline_mode<synchronous>, transform_indices = @transform_2, window_bounds = array<i64: 1, 32>}, {pipeline_mode = #tpu.pipeline_mode<synchronous>, transform_indices = @transform_3, window_bounds = array<i64: 8, 32>}, {transform_indices = @transform_4, window_bounds = array<i64: 1, 8, 32>}]} {
    %c0 = arith.constant 0 : index
    %c0_0 = arith.constant 0 : index
    %c0_1 = arith.constant 0 : index
    %0 = vector.load %arg1[%c0, %c0_0, %c0_1] : memref<1x8x16xf32, #tpu.memory_space<vmem>>, vector<1x8x16xf32>
    %1 = vector.shape_cast %0 : vector<1x8x16xf32> to vector<8x16xf32>
    %2 = arith.truncf %1 : vector<8x16xf32> to vector<8x16xbf16>
    %c0_2 = arith.constant 0 : index
    %c0_3 = arith.constant 0 : index
    %3 = vector.load %arg2[%c0_2, %c0_3] : memref<16x32xbf16, #tpu.memory_space<vmem>>, vector<16x32xbf16>
    %cst = arith.constant dense<0.000000e+00> : vector<8x32xf32>
    %4 = tpu.matmul %2, %3, %cst {dimension_numbers = #tpu.dot_dimension_numbers<[1], [0], [0], [1], [0, 0, 1, 1], [], []>} : vector<8x16xbf16>, vector<16x32xbf16>, vector<8x32xf32> -> vector<8x32xf32>
    %c0_4 = arith.constant 0 : index
    %c0_5 = arith.constant 0 : index
    %5 = vector.load %arg3[%c0_4, %c0_5] : memref<1x32xf32, #tpu.memory_space<vmem>>, vector<1x32xf32>
    %6 = vector.broadcast %5 : vector<1x32xf32> to vector<8x32xf32>
    %7 = arith.addf %4, %6 : vector<8x32xf32>
    %c0_6 = arith.constant 0 : index
    %c0_7 = arith.constant 0 : index
    %8 = vector.load %arg4[%c0_6, %c0_7] : memref<8x32xf32, #tpu.memory_space<vmem>>, vector<8x32xf32>
    %9 = arith.addf %7, %8 : vector<8x32xf32>
    %10 = arith.truncf %9 : vector<8x32xf32> to vector<8x32xbf16>
    %c0_8 = arith.constant 0 : index
    %c0_9 = arith.constant 0 : index
    %c0_10 = arith.constant 0 : index
    %11 = vector.load %arg5[%c0_8, %c0_9, %c0_10] : memref<1x8x32xbf16, #tpu.memory_space<vmem>>, vector<1x8x32xbf16>
    %12 = vector.shape_cast %11 : vector<1x8x32xbf16> to vector<8x32xbf16>
    %13 = vector.shape_cast %10 : vector<8x32xbf16> to vector<1x8x32xbf16>
    tpu.vector_store %arg5[%c0_8, %c0_9, %c0_10], %13 {strides = array<i32>} : memref<1x8x32xbf16, #tpu.memory_space<vmem>>, vector<1x8x32xbf16>,
    return
  }
  func.func @transform_0(%arg0: i32) -> (i32, i32, i32) {
    %c0_i32 = arith.constant 0 : i32
    %c0_i32_0 = arith.constant 0 : i32
    %c0_i32_1 = arith.constant 0 : i32
    return %arg0, %c0_i32, %c0_i32_0 : i32, i32, i32
  }
  func.func @transform_1(%arg0: i32) -> (i32, i32) {
    %c0_i32 = arith.constant 0 : i32
    %c0_i32_0 = arith.constant 0 : i32
    %c0_i32_1 = arith.constant 0 : i32
    return %c0_i32, %c0_i32_0 : i32, i32
  }
  func.func @transform_2(%arg0: i32) -> (i32, i32) {
    %c0_i32 = arith.constant 0 : i32
    %c0_i32_0 = arith.constant 0 : i32
    %c0_i32_1 = arith.constant 0 : i32
    return %c0_i32, %c0_i32_0 : i32, i32
  }
  func.func @transform_3(%arg0: i32) -> (i32, i32) {
    %c0_i32 = arith.constant 0 : i32
    %c0_i32_0 = arith.constant 0 : i32
    %c0_i32_1 = arith.constant 0 : i32
    return %c0_i32, %c0_i32_0 : i32, i32
  }
  func.func @transform_4(%arg0: i32) -> (i32, i32, i32) {
    %c0_i32 = arith.constant 0 : i32
    %c0_i32_0 = arith.constant 0 : i32
    %c0_i32_1 = arith.constant 0 : i32
    return %arg0, %c0_i32, %c0_i32_0 : i32, i32, i32
  }
}

module attributes {stable_mosaic.version = 11 : i64} {
  func.func @_encoder_layer_kernel(%arg0: i32, %arg1: memref<1x8x32xbf16, #tpu.memory_space<vmem>>, %arg2: memref<32x96xbf16, #tpu.memory_space<vmem>>, %arg3: memref<1x96xf32, #tpu.memory_space<vmem>>, %arg4: memref<32x32xbf16, #tpu.memory_space<vmem>>, %arg5: memref<1x32xf32, #tpu.memory_space<vmem>>, %arg6: memref<1x32xf32, #tpu.memory_space<vmem>>, %arg7: memref<1x32xf32, #tpu.memory_space<vmem>>, %arg8: memref<32x32xbf16, #tpu.memory_space<vmem>>, %arg9: memref<1x32xf32, #tpu.memory_space<vmem>>, %arg10: memref<32x32xbf16, #tpu.memory_space<vmem>>, %arg11: memref<1x32xf32, #tpu.memory_space<vmem>>, %arg12: memref<1x32xf32, #tpu.memory_space<vmem>>, %arg13: memref<1x32xf32, #tpu.memory_space<vmem>>, %arg14: memref<1x8x32xbf16, #tpu.memory_space<vmem>>) attributes {dimension_semantics = [#tpu.dimension_semantics<parallel>], iteration_bounds = array<i64: 2>, scalar_prefetch = 0 : i64, scratch_operands = 0 : i64, tpu.core_type = #tpu.core_type<tc>, window_params = [{transform_indices = @transform_0, window_bounds = array<i64: 1, 8, 32>}, {pipeline_mode = #tpu.pipeline_mode<synchronous>, transform_indices = @transform_1, window_bounds = array<i64: 32, 96>}, {pipeline_mode = #tpu.pipeline_mode<synchronous>, transform_indices = @transform_2, window_bounds = array<i64: 1, 96>}, {pipeline_mode = #tpu.pipeline_mode<synchronous>, transform_indices = @transform_3, window_bounds = array<i64: 32, 32>}, {pipeline_mode = #tpu.pipeline_mode<synchronous>, transform_indices = @transform_4, window_bounds = array<i64: 1, 32>}, {pipeline_mode = #tpu.pipeline_mode<synchronous>, transform_indices = @transform_5, window_bounds = array<i64: 1, 32>}, {pipeline_mode = #tpu.pipeline_mode<synchronous>, transform_indices = @transform_6, window_bounds = array<i64: 1, 32>}, {pipeline_mode = #tpu.pipeline_mode<synchronous>, transform_indices = @transform_7, window_bounds = array<i64: 32, 32>}, {pipeline_mode = #tpu.pipeline_mode<synchronous>, transform_indices = @transform_8, window_bounds = array<i64: 1, 32>}, {pipeline_mode = #tpu.pipeline_mode<synchronous>, transform_indices = @transform_9, window_bounds = array<i64: 32, 32>}, {pipeline_mode = #tpu.pipeline_mode<synchronous>, transform_indices = @transform_10, window_bounds = array<i64: 1, 32>}, {pipeline_mode = #tpu.pipeline_mode<synchronous>, transform_indices = @transform_11, window_bounds = array<i64: 1, 32>}, {pipeline_mode = #tpu.pipeline_mode<synchronous>, transform_indices = @transform_12, window_bounds = array<i64: 1, 32>}, {transform_indices = @transform_13, window_bounds = array<i64: 1, 8, 32>}]} {
    %c0 = arith.constant 0 : index
    %c0_0 = arith.constant 0 : index
    %c0_1 = arith.constant 0 : index
    %0 = vector.load %arg1[%c0, %c0_0, %c0_1] : memref<1x8x32xbf16, #tpu.memory_space<vmem>>, vector<1x8x32xbf16>
    %1 = vector.shape_cast %0 : vector<1x8x32xbf16> to vector<8x32xbf16>
    %2 = arith.extf %1 : vector<8x32xbf16> to vector<8x32xf32>
    %3 = arith.truncf %2 : vector<8x32xf32> to vector<8x32xbf16>
    %c0_2 = arith.constant 0 : index
    %c0_3 = arith.constant 0 : index
    %4 = vector.load %arg2[%c0_2, %c0_3] : memref<32x96xbf16, #tpu.memory_space<vmem>>, vector<32x96xbf16>
    %cst = arith.constant dense<0.000000e+00> : vector<8x96xf32>
    %5 = tpu.matmul %3, %4, %cst {dimension_numbers = #tpu.dot_dimension_numbers<[1], [0], [0], [1], [0, 0, 1, 1], [], []>} : vector<8x32xbf16>, vector<32x96xbf16>, vector<8x96xf32> -> vector<8x96xf32>
    %c0_4 = arith.constant 0 : index
    %c0_5 = arith.constant 0 : index
    %6 = vector.load %arg3[%c0_4, %c0_5] : memref<1x96xf32, #tpu.memory_space<vmem>>, vector<1x96xf32>
    %7 = vector.broadcast %6 : vector<1x96xf32> to vector<8x96xf32>
    %8 = arith.addf %5, %7 : vector<8x96xf32>
    %9 = vector.extract_strided_slice %8 {offsets = [0, 0], sizes = [8, 8], strides = [1, 1]} : vector<8x96xf32> to vector<8x8xf32>
    %10 = arith.truncf %9 : vector<8x8xf32> to vector<8x8xbf16>
    %11 = vector.extract_strided_slice %8 {offsets = [0, 32], sizes = [8, 8], strides = [1, 1]} : vector<8x96xf32> to vector<8x8xf32>
    %12 = arith.truncf %11 : vector<8x8xf32> to vector<8x8xbf16>
    %13 = vector.extract_strided_slice %8 {offsets = [0, 64], sizes = [8, 8], strides = [1, 1]} : vector<8x96xf32> to vector<8x8xf32>
    %14 = arith.truncf %13 : vector<8x8xf32> to vector<8x8xbf16>
    %cst_6 = arith.constant dense<0.000000e+00> : vector<8x8xf32>
    %15 = tpu.matmul %10, %12, %cst_6 {dimension_numbers = #tpu.dot_dimension_numbers<[1], [1], [0], [0], [0, 0, 1, 0], [], []>} : vector<8x8xbf16>, vector<8x8xbf16>, vector<8x8xf32> -> vector<8x8xf32>
    %cst_7 = arith.constant 0.353553385 : f32
    %16 = vector.broadcast %cst_7 : f32 to vector<8x8xf32>
    %17 = arith.mulf %15, %16 : vector<8x8xf32>
    %cst_8 = arith.constant dense<0xFF800000> : vector<8xf32>
    %18 = vector.multi_reduction <maximumf>, %17, %cst_8 [1] : vector<8x8xf32> to vector<8xf32>
    %19 = vector.shape_cast %18 : vector<8xf32> to vector<8x1xf32>
    %20 = vector.broadcast %19 : vector<8x1xf32> to vector<8x8xf32>
    %21 = arith.subf %17, %20 : vector<8x8xf32>
    %22 = math.exp %21 : vector<8x8xf32>
    %cst_9 = arith.constant dense<0.000000e+00> : vector<8xf32>
    %23 = vector.multi_reduction <add>, %22, %cst_9 [1] : vector<8x8xf32> to vector<8xf32>
    %24 = vector.shape_cast %23 : vector<8xf32> to vector<8x1xf32>
    %25 = tpu.reciprocal %24 {approx = true} : vector<8x1xf32> -> vector<8x1xf32>
    %26 = vector.broadcast %25 : vector<8x1xf32> to vector<8x8xf32>
    %27 = arith.mulf %22, %26 : vector<8x8xf32>
    %28 = arith.truncf %27 : vector<8x8xf32> to vector<8x8xbf16>
    %cst_10 = arith.constant dense<0.000000e+00> : vector<8x8xf32>
    %29 = tpu.matmul %28, %14, %cst_10 {dimension_numbers = #tpu.dot_dimension_numbers<[1], [0], [0], [1], [0, 0, 1, 1], [], []>} : vector<8x8xbf16>, vector<8x8xbf16>, vector<8x8xf32> -> vector<8x8xf32>
    %30 = vector.extract_strided_slice %8 {offsets = [0, 8], sizes = [8, 8], strides = [1, 1]} : vector<8x96xf32> to vector<8x8xf32>
    %31 = arith.truncf %30 : vector<8x8xf32> to vector<8x8xbf16>
    %32 = vector.extract_strided_slice %8 {offsets = [0, 40], sizes = [8, 8], strides = [1, 1]} : vector<8x96xf32> to vector<8x8xf32>
    %33 = arith.truncf %32 : vector<8x8xf32> to vector<8x8xbf16>
    %34 = vector.extract_strided_slice %8 {offsets = [0, 72], sizes = [8, 8], strides = [1, 1]} : vector<8x96xf32> to vector<8x8xf32>
    %35 = arith.truncf %34 : vector<8x8xf32> to vector<8x8xbf16>
    %cst_11 = arith.constant dense<0.000000e+00> : vector<8x8xf32>
    %36 = tpu.matmul %31, %33, %cst_11 {dimension_numbers = #tpu.dot_dimension_numbers<[1], [1], [0], [0], [0, 0, 1, 0], [], []>} : vector<8x8xbf16>, vector<8x8xbf16>, vector<8x8xf32> -> vector<8x8xf32>
    %cst_12 = arith.constant 0.353553385 : f32
    %37 = vector.broadcast %cst_12 : f32 to vector<8x8xf32>
    %38 = arith.mulf %36, %37 : vector<8x8xf32>
    %cst_13 = arith.constant dense<0xFF800000> : vector<8xf32>
    %39 = vector.multi_reduction <maximumf>, %38, %cst_13 [1] : vector<8x8xf32> to vector<8xf32>
    %40 = vector.shape_cast %39 : vector<8xf32> to vector<8x1xf32>
    %41 = vector.broadcast %40 : vector<8x1xf32> to vector<8x8xf32>
    %42 = arith.subf %38, %41 : vector<8x8xf32>
    %43 = math.exp %42 : vector<8x8xf32>
    %cst_14 = arith.constant dense<0.000000e+00> : vector<8xf32>
    %44 = vector.multi_reduction <add>, %43, %cst_14 [1] : vector<8x8xf32> to vector<8xf32>
    %45 = vector.shape_cast %44 : vector<8xf32> to vector<8x1xf32>
    %46 = tpu.reciprocal %45 {approx = true} : vector<8x1xf32> -> vector<8x1xf32>
    %47 = vector.broadcast %46 : vector<8x1xf32> to vector<8x8xf32>
    %48 = arith.mulf %43, %47 : vector<8x8xf32>
    %49 = arith.truncf %48 : vector<8x8xf32> to vector<8x8xbf16>
    %cst_15 = arith.constant dense<0.000000e+00> : vector<8x8xf32>
    %50 = tpu.matmul %49, %35, %cst_15 {dimension_numbers = #tpu.dot_dimension_numbers<[1], [0], [0], [1], [0, 0, 1, 1], [], []>} : vector<8x8xbf16>, vector<8x8xbf16>, vector<8x8xf32> -> vector<8x8xf32>
    %51 = vector.extract_strided_slice %8 {offsets = [0, 16], sizes = [8, 8], strides = [1, 1]} : vector<8x96xf32> to vector<8x8xf32>
    %52 = arith.truncf %51 : vector<8x8xf32> to vector<8x8xbf16>
    %53 = vector.extract_strided_slice %8 {offsets = [0, 48], sizes = [8, 8], strides = [1, 1]} : vector<8x96xf32> to vector<8x8xf32>
    %54 = arith.truncf %53 : vector<8x8xf32> to vector<8x8xbf16>
    %55 = vector.extract_strided_slice %8 {offsets = [0, 80], sizes = [8, 8], strides = [1, 1]} : vector<8x96xf32> to vector<8x8xf32>
    %56 = arith.truncf %55 : vector<8x8xf32> to vector<8x8xbf16>
    %cst_16 = arith.constant dense<0.000000e+00> : vector<8x8xf32>
    %57 = tpu.matmul %52, %54, %cst_16 {dimension_numbers = #tpu.dot_dimension_numbers<[1], [1], [0], [0], [0, 0, 1, 0], [], []>} : vector<8x8xbf16>, vector<8x8xbf16>, vector<8x8xf32> -> vector<8x8xf32>
    %cst_17 = arith.constant 0.353553385 : f32
    %58 = vector.broadcast %cst_17 : f32 to vector<8x8xf32>
    %59 = arith.mulf %57, %58 : vector<8x8xf32>
    %cst_18 = arith.constant dense<0xFF800000> : vector<8xf32>
    %60 = vector.multi_reduction <maximumf>, %59, %cst_18 [1] : vector<8x8xf32> to vector<8xf32>
    %61 = vector.shape_cast %60 : vector<8xf32> to vector<8x1xf32>
    %62 = vector.broadcast %61 : vector<8x1xf32> to vector<8x8xf32>
    %63 = arith.subf %59, %62 : vector<8x8xf32>
    %64 = math.exp %63 : vector<8x8xf32>
    %cst_19 = arith.constant dense<0.000000e+00> : vector<8xf32>
    %65 = vector.multi_reduction <add>, %64, %cst_19 [1] : vector<8x8xf32> to vector<8xf32>
    %66 = vector.shape_cast %65 : vector<8xf32> to vector<8x1xf32>
    %67 = tpu.reciprocal %66 {approx = true} : vector<8x1xf32> -> vector<8x1xf32>
    %68 = vector.broadcast %67 : vector<8x1xf32> to vector<8x8xf32>
    %69 = arith.mulf %64, %68 : vector<8x8xf32>
    %70 = arith.truncf %69 : vector<8x8xf32> to vector<8x8xbf16>
    %cst_20 = arith.constant dense<0.000000e+00> : vector<8x8xf32>
    %71 = tpu.matmul %70, %56, %cst_20 {dimension_numbers = #tpu.dot_dimension_numbers<[1], [0], [0], [1], [0, 0, 1, 1], [], []>} : vector<8x8xbf16>, vector<8x8xbf16>, vector<8x8xf32> -> vector<8x8xf32>
    %72 = vector.extract_strided_slice %8 {offsets = [0, 24], sizes = [8, 8], strides = [1, 1]} : vector<8x96xf32> to vector<8x8xf32>
    %73 = arith.truncf %72 : vector<8x8xf32> to vector<8x8xbf16>
    %74 = vector.extract_strided_slice %8 {offsets = [0, 56], sizes = [8, 8], strides = [1, 1]} : vector<8x96xf32> to vector<8x8xf32>
    %75 = arith.truncf %74 : vector<8x8xf32> to vector<8x8xbf16>
    %76 = vector.extract_strided_slice %8 {offsets = [0, 88], sizes = [8, 8], strides = [1, 1]} : vector<8x96xf32> to vector<8x8xf32>
    %77 = arith.truncf %76 : vector<8x8xf32> to vector<8x8xbf16>
    %cst_21 = arith.constant dense<0.000000e+00> : vector<8x8xf32>
    %78 = tpu.matmul %73, %75, %cst_21 {dimension_numbers = #tpu.dot_dimension_numbers<[1], [1], [0], [0], [0, 0, 1, 0], [], []>} : vector<8x8xbf16>, vector<8x8xbf16>, vector<8x8xf32> -> vector<8x8xf32>
    %cst_22 = arith.constant 0.353553385 : f32
    %79 = vector.broadcast %cst_22 : f32 to vector<8x8xf32>
    %80 = arith.mulf %78, %79 : vector<8x8xf32>
    %cst_23 = arith.constant dense<0xFF800000> : vector<8xf32>
    %81 = vector.multi_reduction <maximumf>, %80, %cst_23 [1] : vector<8x8xf32> to vector<8xf32>
    %82 = vector.shape_cast %81 : vector<8xf32> to vector<8x1xf32>
    %83 = vector.broadcast %82 : vector<8x1xf32> to vector<8x8xf32>
    %84 = arith.subf %80, %83 : vector<8x8xf32>
    %85 = math.exp %84 : vector<8x8xf32>
    %cst_24 = arith.constant dense<0.000000e+00> : vector<8xf32>
    %86 = vector.multi_reduction <add>, %85, %cst_24 [1] : vector<8x8xf32> to vector<8xf32>
    %87 = vector.shape_cast %86 : vector<8xf32> to vector<8x1xf32>
    %88 = tpu.reciprocal %87 {approx = true} : vector<8x1xf32> -> vector<8x1xf32>
    %89 = vector.broadcast %88 : vector<8x1xf32> to vector<8x8xf32>
    %90 = arith.mulf %85, %89 : vector<8x8xf32>
    %91 = arith.truncf %90 : vector<8x8xf32> to vector<8x8xbf16>
    %cst_25 = arith.constant dense<0.000000e+00> : vector<8x8xf32>
    %92 = tpu.matmul %91, %77, %cst_25 {dimension_numbers = #tpu.dot_dimension_numbers<[1], [0], [0], [1], [0, 0, 1, 1], [], []>} : vector<8x8xbf16>, vector<8x8xbf16>, vector<8x8xf32> -> vector<8x8xf32>
    %93 = tpu.concatenate %29, %50, %71, %92 in 1 : vector<8x8xf32>, vector<8x8xf32>, vector<8x8xf32>, vector<8x8xf32> -> vector<8x32xf32>
    %94 = arith.truncf %93 : vector<8x32xf32> to vector<8x32xbf16>
    %c0_26 = arith.constant 0 : index
    %c0_27 = arith.constant 0 : index
    %95 = vector.load %arg4[%c0_26, %c0_27] : memref<32x32xbf16, #tpu.memory_space<vmem>>, vector<32x32xbf16>
    %cst_28 = arith.constant dense<0.000000e+00> : vector<8x32xf32>
    %96 = tpu.matmul %94, %95, %cst_28 {dimension_numbers = #tpu.dot_dimension_numbers<[1], [0], [0], [1], [0, 0, 1, 1], [], []>} : vector<8x32xbf16>, vector<32x32xbf16>, vector<8x32xf32> -> vector<8x32xf32>
    %c0_29 = arith.constant 0 : index
    %c0_30 = arith.constant 0 : index
    %97 = vector.load %arg5[%c0_29, %c0_30] : memref<1x32xf32, #tpu.memory_space<vmem>>, vector<1x32xf32>
    %98 = vector.broadcast %97 : vector<1x32xf32> to vector<8x32xf32>
    %99 = arith.addf %96, %98 : vector<8x32xf32>
    %100 = arith.addf %2, %99 : vector<8x32xf32>
    %cst_31 = arith.constant dense<0.000000e+00> : vector<8xf32>
    %101 = vector.multi_reduction <add>, %100, %cst_31 [1] : vector<8x32xf32> to vector<8xf32>
    %102 = vector.shape_cast %101 : vector<8xf32> to vector<8x1xf32>
    %cst_32 = arith.constant 3.200000e+01 : f32
    %103 = vector.broadcast %cst_32 : f32 to vector<8x1xf32>
    %104 = arith.divf %102, %103 : vector<8x1xf32>
    %105 = vector.broadcast %104 : vector<8x1xf32> to vector<8x32xf32>
    %106 = arith.subf %100, %105 : vector<8x32xf32>
    %107 = vector.broadcast %104 : vector<8x1xf32> to vector<8x32xf32>
    %108 = arith.subf %100, %107 : vector<8x32xf32>
    %109 = arith.mulf %106, %108 : vector<8x32xf32>
    %cst_33 = arith.constant dense<0.000000e+00> : vector<8xf32>
    %110 = vector.multi_reduction <add>, %109, %cst_33 [1] : vector<8x32xf32> to vector<8xf32>
    %111 = vector.shape_cast %110 : vector<8xf32> to vector<8x1xf32>
    %cst_34 = arith.constant 3.200000e+01 : f32
    %112 = vector.broadcast %cst_34 : f32 to vector<8x1xf32>
    %113 = arith.divf %111, %112 : vector<8x1xf32>
    %114 = vector.broadcast %104 : vector<8x1xf32> to vector<8x32xf32>
    %115 = arith.subf %100, %114 : vector<8x32xf32>
    %cst_35 = arith.constant 9.99999974E-6 : f32
    %116 = vector.broadcast %cst_35 : f32 to vector<8x1xf32>
    %117 = arith.addf %113, %116 : vector<8x1xf32>
    %118 = math.rsqrt %117 : vector<8x1xf32>
    %119 = vector.broadcast %118 : vector<8x1xf32> to vector<8x32xf32>
    %120 = arith.mulf %115, %119 : vector<8x32xf32>
    %c0_36 = arith.constant 0 : index
    %c0_37 = arith.constant 0 : index
    %121 = vector.load %arg6[%c0_36, %c0_37] : memref<1x32xf32, #tpu.memory_space<vmem>>, vector<1x32xf32>
    %122 = vector.broadcast %121 : vector<1x32xf32> to vector<8x32xf32>
    %123 = arith.mulf %120, %122 : vector<8x32xf32>
    %c0_38 = arith.constant 0 : index
    %c0_39 = arith.constant 0 : index
    %124 = vector.load %arg7[%c0_38, %c0_39] : memref<1x32xf32, #tpu.memory_space<vmem>>, vector<1x32xf32>
    %125 = vector.broadcast %124 : vector<1x32xf32> to vector<8x32xf32>
    %126 = arith.addf %123, %125 : vector<8x32xf32>
    %127 = arith.truncf %126 : vector<8x32xf32> to vector<8x32xbf16>
    %c0_40 = arith.constant 0 : index
    %c0_41 = arith.constant 0 : index
    %128 = vector.load %arg8[%c0_40, %c0_41] : memref<32x32xbf16, #tpu.memory_space<vmem>>, vector<32x32xbf16>
    %cst_42 = arith.constant dense<0.000000e+00> : vector<8x32xf32>
    %129 = tpu.matmul %127, %128, %cst_42 {dimension_numbers = #tpu.dot_dimension_numbers<[1], [0], [0], [1], [0, 0, 1, 1], [], []>} : vector<8x32xbf16>, vector<32x32xbf16>, vector<8x32xf32> -> vector<8x32xf32>
    %c0_43 = arith.constant 0 : index
    %c0_44 = arith.constant 0 : index
    %130 = vector.load %arg9[%c0_43, %c0_44] : memref<1x32xf32, #tpu.memory_space<vmem>>, vector<1x32xf32>
    %131 = vector.broadcast %130 : vector<1x32xf32> to vector<8x32xf32>
    %132 = arith.addf %129, %131 : vector<8x32xf32>
    %cst_45 = arith.constant 0.000000e+00 : f32
    %133 = vector.broadcast %cst_45 : f32 to vector<8x32xf32>
    %134 = arith.maximumf %132, %133 : vector<8x32xf32>
    %135 = arith.truncf %134 : vector<8x32xf32> to vector<8x32xbf16>
    %c0_46 = arith.constant 0 : index
    %c0_47 = arith.constant 0 : index
    %136 = vector.load %arg10[%c0_46, %c0_47] : memref<32x32xbf16, #tpu.memory_space<vmem>>, vector<32x32xbf16>
    %cst_48 = arith.constant dense<0.000000e+00> : vector<8x32xf32>
    %137 = tpu.matmul %135, %136, %cst_48 {dimension_numbers = #tpu.dot_dimension_numbers<[1], [0], [0], [1], [0, 0, 1, 1], [], []>} : vector<8x32xbf16>, vector<32x32xbf16>, vector<8x32xf32> -> vector<8x32xf32>
    %c0_49 = arith.constant 0 : index
    %c0_50 = arith.constant 0 : index
    %138 = vector.load %arg11[%c0_49, %c0_50] : memref<1x32xf32, #tpu.memory_space<vmem>>, vector<1x32xf32>
    %139 = vector.broadcast %138 : vector<1x32xf32> to vector<8x32xf32>
    %140 = arith.addf %137, %139 : vector<8x32xf32>
    %141 = arith.addf %126, %140 : vector<8x32xf32>
    %cst_51 = arith.constant dense<0.000000e+00> : vector<8xf32>
    %142 = vector.multi_reduction <add>, %141, %cst_51 [1] : vector<8x32xf32> to vector<8xf32>
    %143 = vector.shape_cast %142 : vector<8xf32> to vector<8x1xf32>
    %cst_52 = arith.constant 3.200000e+01 : f32
    %144 = vector.broadcast %cst_52 : f32 to vector<8x1xf32>
    %145 = arith.divf %143, %144 : vector<8x1xf32>
    %146 = vector.broadcast %145 : vector<8x1xf32> to vector<8x32xf32>
    %147 = arith.subf %141, %146 : vector<8x32xf32>
    %148 = vector.broadcast %145 : vector<8x1xf32> to vector<8x32xf32>
    %149 = arith.subf %141, %148 : vector<8x32xf32>
    %150 = arith.mulf %147, %149 : vector<8x32xf32>
    %cst_53 = arith.constant dense<0.000000e+00> : vector<8xf32>
    %151 = vector.multi_reduction <add>, %150, %cst_53 [1] : vector<8x32xf32> to vector<8xf32>
    %152 = vector.shape_cast %151 : vector<8xf32> to vector<8x1xf32>
    %cst_54 = arith.constant 3.200000e+01 : f32
    %153 = vector.broadcast %cst_54 : f32 to vector<8x1xf32>
    %154 = arith.divf %152, %153 : vector<8x1xf32>
    %155 = vector.broadcast %145 : vector<8x1xf32> to vector<8x32xf32>
    %156 = arith.subf %141, %155 : vector<8x32xf32>
    %cst_55 = arith.constant 9.99999974E-6 : f32
    %157 = vector.broadcast %cst_55 : f32 to vector<8x1xf32>
    %158 = arith.addf %154, %157 : vector<8x1xf32>
    %159 = math.rsqrt %158 : vector<8x1xf32>
    %160 = vector.broadcast %159 : vector<8x1xf32> to vector<8x32xf32>
    %161 = arith.mulf %156, %160 : vector<8x32xf32>
    %c0_56 = arith.constant 0 : index
    %c0_57 = arith.constant 0 : index
    %162 = vector.load %arg12[%c0_56, %c0_57] : memref<1x32xf32, #tpu.memory_space<vmem>>, vector<1x32xf32>
    %163 = vector.broadcast %162 : vector<1x32xf32> to vector<8x32xf32>
    %164 = arith.mulf %161, %163 : vector<8x32xf32>
    %c0_58 = arith.constant 0 : index
    %c0_59 = arith.constant 0 : index
    %165 = vector.load %arg13[%c0_58, %c0_59] : memref<1x32xf32, #tpu.memory_space<vmem>>, vector<1x32xf32>
    %166 = vector.broadcast %165 : vector<1x32xf32> to vector<8x32xf32>
    %167 = arith.addf %164, %166 : vector<8x32xf32>
    %168 = arith.truncf %167 : vector<8x32xf32> to vector<8x32xbf16>
    %c0_60 = arith.constant 0 : index
    %c0_61 = arith.constant 0 : index
    %c0_62 = arith.constant 0 : index
    %169 = vector.load %arg14[%c0_60, %c0_61, %c0_62] : memref<1x8x32xbf16, #tpu.memory_space<vmem>>, vector<1x8x32xbf16>
    %170 = vector.shape_cast %169 : vector<1x8x32xbf16> to vector<8x32xbf16>
    %171 = vector.shape_cast %168 : vector<8x32xbf16> to vector<1x8x32xbf16>
    tpu.vector_store %arg14[%c0_60, %c0_61, %c0_62], %171 {strides = array<i32>} : memref<1x8x32xbf16, #tpu.memory_space<vmem>>, vector<1x8x32xbf16>,
    return
  }
  func.func @transform_0(%arg0: i32) -> (i32, i32, i32) {
    %c0_i32 = arith.constant 0 : i32
    %c0_i32_0 = arith.constant 0 : i32
    %c0_i32_1 = arith.constant 0 : i32
    return %arg0, %c0_i32, %c0_i32_0 : i32, i32, i32
  }
  func.func @transform_1(%arg0: i32) -> (i32, i32) {
    %c0_i32 = arith.constant 0 : i32
    %c0_i32_0 = arith.constant 0 : i32
    %c0_i32_1 = arith.constant 0 : i32
    return %c0_i32, %c0_i32_0 : i32, i32
  }
  func.func @transform_2(%arg0: i32) -> (i32, i32) {
    %c0_i32 = arith.constant 0 : i32
    %c0_i32_0 = arith.constant 0 : i32
    %c0_i32_1 = arith.constant 0 : i32
    return %c0_i32, %c0_i32_0 : i32, i32
  }
  func.func @transform_3(%arg0: i32) -> (i32, i32) {
    %c0_i32 = arith.constant 0 : i32
    %c0_i32_0 = arith.constant 0 : i32
    %c0_i32_1 = arith.constant 0 : i32
    return %c0_i32, %c0_i32_0 : i32, i32
  }
  func.func @transform_4(%arg0: i32) -> (i32, i32) {
    %c0_i32 = arith.constant 0 : i32
    %c0_i32_0 = arith.constant 0 : i32
    %c0_i32_1 = arith.constant 0 : i32
    return %c0_i32, %c0_i32_0 : i32, i32
  }
  func.func @transform_5(%arg0: i32) -> (i32, i32) {
    %c0_i32 = arith.constant 0 : i32
    %c0_i32_0 = arith.constant 0 : i32
    %c0_i32_1 = arith.constant 0 : i32
    return %c0_i32, %c0_i32_0 : i32, i32
  }
  func.func @transform_6(%arg0: i32) -> (i32, i32) {
    %c0_i32 = arith.constant 0 : i32
    %c0_i32_0 = arith.constant 0 : i32
    %c0_i32_1 = arith.constant 0 : i32
    return %c0_i32, %c0_i32_0 : i32, i32
  }
  func.func @transform_7(%arg0: i32) -> (i32, i32) {
    %c0_i32 = arith.constant 0 : i32
    %c0_i32_0 = arith.constant 0 : i32
    %c0_i32_1 = arith.constant 0 : i32
    return %c0_i32, %c0_i32_0 : i32, i32
  }
  func.func @transform_8(%arg0: i32) -> (i32, i32) {
    %c0_i32 = arith.constant 0 : i32
    %c0_i32_0 = arith.constant 0 : i32
    %c0_i32_1 = arith.constant 0 : i32
    return %c0_i32, %c0_i32_0 : i32, i32
  }
  func.func @transform_9(%arg0: i32) -> (i32, i32) {
    %c0_i32 = arith.constant 0 : i32
    %c0_i32_0 = arith.constant 0 : i32
    %c0_i32_1 = arith.constant 0 : i32
    return %c0_i32, %c0_i32_0 : i32, i32
  }
  func.func @transform_10(%arg0: i32) -> (i32, i32) {
    %c0_i32 = arith.constant 0 : i32
    %c0_i32_0 = arith.constant 0 : i32
    %c0_i32_1 = arith.constant 0 : i32
    return %c0_i32, %c0_i32_0 : i32, i32
  }
  func.func @transform_11(%arg0: i32) -> (i32, i32) {
    %c0_i32 = arith.constant 0 : i32
    %c0_i32_0 = arith.constant 0 : i32
    %c0_i32_1 = arith.constant 0 : i32
    return %c0_i32, %c0_i32_0 : i32, i32
  }
  func.func @transform_12(%arg0: i32) -> (i32, i32) {
    %c0_i32 = arith.constant 0 : i32
    %c0_i32_0 = arith.constant 0 : i32
    %c0_i32_1 = arith.constant 0 : i32
    return %c0_i32, %c0_i32_0 : i32, i32
  }
  func.func @transform_13(%arg0: i32) -> (i32, i32, i32) {
    %c0_i32 = arith.constant 0 : i32
    %c0_i32_0 = arith.constant 0 : i32
    %c0_i32_1 = arith.constant 0 : i32
    return %arg0, %c0_i32, %c0_i32_0 : i32, i32, i32
  }
}

module attributes {stable_mosaic.version = 11 : i64} {
  func.func @_linear_kernel(%arg0: i32, %arg1: i32, %arg2: i32, %arg3: memref<16x32xbf16, #tpu.memory_space<vmem>>, %arg4: memref<32x128xbf16, #tpu.memory_space<vmem>>, %arg5: memref<1x128xf32, #tpu.memory_space<vmem>>, %arg6: memref<16x128xf32, #tpu.memory_space<vmem>>, %arg7: memref<16x128xf32, #tpu.memory_space<vmem>>) attributes {dimension_semantics = [#tpu.dimension_semantics<parallel>, #tpu.dimension_semantics<parallel>, #tpu.dimension_semantics<arbitrary>], iteration_bounds = array<i64: 1, 1, 1>, scalar_prefetch = 0 : i64, scratch_operands = 1 : i64, tpu.core_type = #tpu.core_type<tc>, window_params = [{transform_indices = @transform_0, window_bounds = array<i64: 16, 32>}, {transform_indices = @transform_1, window_bounds = array<i64: 32, 128>}, {transform_indices = @transform_2, window_bounds = array<i64: 1, 128>}, {transform_indices = @transform_3, window_bounds = array<i64: 16, 128>}]} {
    %c0_i32 = arith.constant 0 : i32
    %0 = arith.cmpi eq, %arg2, %c0_i32 : i32
    %1 = arith.extui %0 : i1 to i32
    %c0_i32_0 = arith.constant 0 : i32
    %2 = arith.cmpi ne, %1, %c0_i32_0 : i32
    scf.if %2 {
      %cst_10 = arith.constant 0.000000e+00 : f32
      %12 = vector.broadcast %cst_10 : f32 to vector<16x128xf32>
      %c0_11 = arith.constant 0 : index
      %c0_12 = arith.constant 0 : index
      %13 = vector.load %arg7[%c0_11, %c0_12] : memref<16x128xf32, #tpu.memory_space<vmem>>, vector<16x128xf32>
      tpu.vector_store %arg7[%c0_11, %c0_12], %12 {strides = array<i32>} : memref<16x128xf32, #tpu.memory_space<vmem>>, vector<16x128xf32>,
    } else {
    }
    %c0 = arith.constant 0 : index
    %c0_1 = arith.constant 0 : index
    %3 = vector.load %arg7[%c0, %c0_1] : memref<16x128xf32, #tpu.memory_space<vmem>>, vector<16x128xf32>
    %c0_2 = arith.constant 0 : index
    %c0_3 = arith.constant 0 : index
    %4 = vector.load %arg3[%c0_2, %c0_3] : memref<16x32xbf16, #tpu.memory_space<vmem>>, vector<16x32xbf16>
    %c0_4 = arith.constant 0 : index
    %c0_5 = arith.constant 0 : index
    %5 = vector.load %arg4[%c0_4, %c0_5] : memref<32x128xbf16, #tpu.memory_space<vmem>>, vector<32x128xbf16>
    %cst = arith.constant dense<0.000000e+00> : vector<16x128xf32>
    %6 = tpu.matmul %4, %5, %cst {dimension_numbers = #tpu.dot_dimension_numbers<[1], [0], [0], [1], [0, 0, 1, 1], [], []>} : vector<16x32xbf16>, vector<32x128xbf16>, vector<16x128xf32> -> vector<16x128xf32>
    %7 = arith.addf %3, %6 : vector<16x128xf32>
    %c0_6 = arith.constant 0 : index
    %c0_7 = arith.constant 0 : index
    %8 = vector.load %arg7[%c0_6, %c0_7] : memref<16x128xf32, #tpu.memory_space<vmem>>, vector<16x128xf32>
    tpu.vector_store %arg7[%c0_6, %c0_7], %7 {strides = array<i32>} : memref<16x128xf32, #tpu.memory_space<vmem>>, vector<16x128xf32>,
    %c0_i32_8 = arith.constant 0 : i32
    %9 = arith.cmpi eq, %arg2, %c0_i32_8 : i32
    %10 = arith.extui %9 : i1 to i32
    %c0_i32_9 = arith.constant 0 : i32
    %11 = arith.cmpi ne, %10, %c0_i32_9 : i32
    scf.if %11 {
      %c0_10 = arith.constant 0 : index
      %c0_11 = arith.constant 0 : index
      %12 = vector.load %arg7[%c0_10, %c0_11] : memref<16x128xf32, #tpu.memory_space<vmem>>, vector<16x128xf32>
      %c0_12 = arith.constant 0 : index
      %c0_13 = arith.constant 0 : index
      %13 = vector.load %arg5[%c0_12, %c0_13] : memref<1x128xf32, #tpu.memory_space<vmem>>, vector<1x128xf32>
      %14 = vector.broadcast %13 : vector<1x128xf32> to vector<16x128xf32>
      %15 = arith.addf %12, %14 : vector<16x128xf32>
      %c0_14 = arith.constant 0 : index
      %c0_15 = arith.constant 0 : index
      %16 = vector.load %arg6[%c0_14, %c0_15] : memref<16x128xf32, #tpu.memory_space<vmem>>, vector<16x128xf32>
      tpu.vector_store %arg6[%c0_14, %c0_15], %15 {strides = array<i32>} : memref<16x128xf32, #tpu.memory_space<vmem>>, vector<16x128xf32>,
    } else {
    }
    return
  }
  func.func @transform_0(%arg0: i32, %arg1: i32, %arg2: i32) -> (i32, i32) {
    %c0_i32 = arith.constant 0 : i32
    return %arg0, %arg2 : i32, i32
  }
  func.func @transform_1(%arg0: i32, %arg1: i32, %arg2: i32) -> (i32, i32) {
    %c0_i32 = arith.constant 0 : i32
    return %arg2, %arg1 : i32, i32
  }
  func.func @transform_2(%arg0: i32, %arg1: i32, %arg2: i32) -> (i32, i32) {
    %c0_i32 = arith.constant 0 : i32
    %c0_i32_0 = arith.constant 0 : i32
    return %c0_i32, %arg1 : i32, i32
  }
  func.func @transform_3(%arg0: i32, %arg1: i32, %arg2: i32) -> (i32, i32) {
    %c0_i32 = arith.constant 0 : i32
    return %arg0, %arg1 : i32, i32
  }
}

</mosaic_0001>

<llo_original>
// kernel: transformer_forward.4
$region0: #{transformer_forward.4}
  #allocation0 [shape = 'u32[]', space=smem, size = 0x4, offset = 0x4, fixed_abs, tag = 'smem constant byte address 0x4 - core index']
  #allocation1 [shape = 'u32[144,128]{1,0:T(1,128)}', space=vmem, size = 0x12000, scoped, tag = 'internal scratch']
  %s0 = inlined_call_operand.vmem [shape: f32[2,8,16], index: 0, kind: input, shape index: {}]
  %s1 = inlined_call_operand.vmem [shape: bf16[16,32], index: 1, kind: input, shape index: {}]
  %s2 = inlined_call_operand.vmem [shape: f32[1,32], index: 2, kind: input, shape index: {}]
  %s3 = inlined_call_operand.vmem [shape: f32[8,32], index: 3, kind: input, shape index: {}]
  %s4 = inlined_call_operand.vmem [shape: bf16[2,8,32], index: 4, kind: output, shape index: {}]
  %s5 = sld [smem:[#allocation0]]
  $region49: #{transformer_forward.4} parent=0
    _
  %s7 = ssub.s32 1, %s5
  %s8 = scalar_select 0, %s7, %s5
  loop: start=0, step=1, limit=4
  $region2: #{transformer_forward.4} parent=0 // loop_pre_header
    _
  $region3: #{transformer_forward.4} parent=0 // loop_header
    %s10 = sphi 0, %s14
    %p11 = scmp.ge.s32.totalorder %s10, 4
    %s20 = sphi 0, %s22
    %s23 = sphi 0, %s20
    %s24 = sphi 0, %s23
    %s40 = sphi 0, %s24
    %s44 = sphi 0, %s44
    %s46 = sphi 0, %s44
    %s47 = sphi 0, %s46
    %s61 = sphi 0, %s47
    %s65 = sphi 0, %s65
    %s67 = sphi 0, %s65
    %s68 = sphi 0, %s67
    %s82 = sphi 0, %s68
    %s86 = sphi 0, %s86
    %s88 = sphi 0, %s86
    %s89 = sphi 0, %s88
    %s103 = sphi 0, %s89
    %s109 = sphi 0, %s111
    %s112 = sphi 0, %s109
    %s113 = sphi 0, %s112
    %s129 = sphi 0, %s113
  $region4: #{transformer_forward.4} parent=0 // loop_header_branch
    %13 = sbr.rel (%p11) target = $region8
  $region5: #{transformer_forward.4} parent=0 // loop_body
    %s15 = ssub.s32 %s10, 1
    %s16 = ssub.s32 %s10, 2
    %s17 = sadd.s32 %s10, 1
    %s18 = ssub.s32 %s10, %s17
    %p19 = scmp.eq.s32.totalorder %s18, 0
    %s21 = sadd.s32 %s20, 1
    %s22 = scalar_select %p19, %s20, %s21
    %p25 = pneg %p19
    %p26 = scmp.eq.s32.totalorder %s10, 1
    %p27 = por %p25, %p26
    %p28 = scmp.ne.s32.totalorder %s20, %s23
    %p29 = scmp.eq.s32.totalorder %s10, 0
    %p30 = por %p28, %p29
    %p31 = scmp.ne.s32.totalorder %s20, %s23
    %p32 = scmp.eq.s32.totalorder %s15, 1
    %p33 = por %p31, %p32
    %p34 = scmp.ne.s32.totalorder %s23, %s24
    %p35 = scmp.eq.s32.totalorder %s15, 0
    %p36 = por %p34, %p35
    %p37 = scmp.ne.s32.totalorder %s23, %s24
    %p38 = scmp.eq.s32.totalorder %s16, 1
    %p39 = por %p37, %p38
    %p41 = scmp.ne.s32.totalorder %s24, %s40
    %p42 = scmp.eq.s32.totalorder %s16, 0
    %p43 = por %p41, %p42
    %s45 = sadd.s32 %s44, 1
    %p48 = scmp.eq.s32.totalorder %s10, 1
    %p49 = scmp.ne.s32.totalorder %s44, %s46
    %p50 = scmp.eq.s32.totalorder %s10, 0
    %p51 = por %p49, %p50
    %p52 = scmp.ne.s32.totalorder %s44, %s46
    %p53 = scmp.eq.s32.totalorder %s15, 1
    %p54 = por %p52, %p53
    %p55 = scmp.ne.s32.totalorder %s46, %s47
    %p56 = scmp.eq.s32.totalorder %s15, 0
    %p57 = por %p55, %p56
    %p58 = scmp.ne.s32.totalorder %s46, %s47
    %p59 = scmp.eq.s32.totalorder %s16, 1
    %p60 = por %p58, %p59
    %p62 = scmp.ne.s32.totalorder %s47, %s61
    %p63 = scmp.eq.s32.totalorder %s16, 0
    %p64 = por %p62, %p63
    %s66 = sadd.s32 %s65, 1
    %p69 = scmp.eq.s32.totalorder %s10, 1
    %p70 = scmp.ne.s32.totalorder %s65, %s67
    %p71 = scmp.eq.s32.totalorder %s10, 0
    %p72 = por %p70, %p71
    %p73 = scmp.ne.s32.totalorder %s65, %s67
    %p74 = scmp.eq.s32.totalorder %s15, 1
    %p75 = por %p73, %p74
    %p76 = scmp.ne.s32.totalorder %s67, %s68
    %p77 = scmp.eq.s32.totalorder %s15, 0
    %p78 = por %p76, %p77
    %p79 = scmp.ne.s32.totalorder %s67, %s68
    %p80 = scmp.eq.s32.totalorder %s16, 1
    %p81 = por %p79, %p80
    %p83 = scmp.ne.s32.totalorder %s68, %s82
    %p84 = scmp.eq.s32.totalorder %s16, 0
    %p85 = por %p83, %p84
    %s87 = sadd.s32 %s86, 1
    %p90 = scmp.eq.s32.totalorder %s10, 1
    %p91 = scmp.ne.s32.totalorder %s86, %s88
    %p92 = scmp.eq.s32.totalorder %s10, 0
    %p93 = por %p91, %p92
    %p94 = scmp.ne.s32.totalorder %s86, %s88
    %p95 = scmp.eq.s32.totalorder %s15, 1
    %p96 = por %p94, %p95
    %p97 = scmp.ne.s32.totalorder %s88, %s89
    %p98 = scmp.eq.s32.totalorder %s15, 0
    %p99 = por %p97, %p98
    %p100 = scmp.ne.s32.totalorder %s88, %s89
    %p101 = scmp.eq.s32.totalorder %s16, 1
    %p102 = por %p100, %p101
    %p104 = scmp.ne.s32.totalorder %s89, %s103
    %p105 = scmp.eq.s32.totalorder %s16, 0
    %p106 = por %p104, %p105
    %s107 = ssub.s32 %s10, %s17
    %p108 = scmp.eq.s32.totalorder %s107, 0
    %s110 = sadd.s32 %s109, 1
    %s111 = scalar_select %p108, %s109, %s110
    %p114 = pneg %p108
    %p115 = scmp.eq.s32.totalorder %s10, 1
    %p116 = por %p114, %p115
    %p117 = scmp.ne.s32.totalorder %s109, %s112
    %p118 = scmp.eq.s32.totalorder %s10, 0
    %p119 = por %p117, %p118
    %p120 = scmp.ne.s32.totalorder %s109, %s112
    %p121 = scmp.eq.s32.totalorder %s15, 1
    %p122 = por %p120, %p121
    %p123 = scmp.ne.s32.totalorder %s112, %s113
    %p124 = scmp.eq.s32.totalorder %s15, 0
    %p125 = por %p123, %p124
    %p126 = scmp.ne.s32.totalorder %s112, %s113
    %p127 = scmp.eq.s32.totalorder %s16, 1
    %p128 = por %p126, %p127
    %p130 = scmp.ne.s32.totalorder %s113, %s129
    %p131 = scmp.eq.s32.totalorder %s16, 0
    %p132 = por %p130, %p131
    %p133 = scmp.le.s32.totalorder 1, %s10
    %p134 = scmp.lt.s32.totalorder %s10, 3
    %p135 = pnand %p133, %p134
    %p136 = pneg %p135
    // Predicated region
    $region9: #{transformer_forward.4} parent=5 // pred_check
      _
    $region10: #{transformer_forward.4} parent=5 // pred_check_branch
      %138 = sbr.rel (%p135) target = $region12
    $region11: #{transformer_forward.4} parent=5 // pred_region
      %s139 = ssub.s32 %s10, 1
      // Predicated region
      $region13: #{transformer_forward.4} parent=11 // pred_check
        %p140 = pneg %p57
      $region14: #{transformer_forward.4} parent=11 // pred_check_branch
        %142 = sbr.rel (%p140) target = $region16
      $region15: #{transformer_forward.4} parent=11 // pred_region
        _
      $region16: #{transformer_forward.4} parent=11 // pred_fallthru
        _
      // Predicated region
      $region17: #{transformer_forward.4} parent=11 // pred_check
        %p143 = pneg %p78
      $region18: #{transformer_forward.4} parent=11 // pred_check_branch
        %145 = sbr.rel (%p143) target = $region20
      $region19: #{transformer_forward.4} parent=11 // pred_region
        _
      $region20: #{transformer_forward.4} parent=11 // pred_fallthru
        _
      // Predicated region
      $region21: #{transformer_forward.4} parent=11 // pred_check
        %p146 = pneg %p99
      $region22: #{transformer_forward.4} parent=11 // pred_check_branch
        %148 = sbr.rel (%p146) target = $region24
      $region23: #{transformer_forward.4} parent=11 // pred_region
        _
      $region24: #{transformer_forward.4} parent=11 // pred_fallthru
        _
    $region12: #{transformer_forward.4} parent=5 // pred_fallthru
      _
    %p149 = scmp.lt.s32.totalorder %s10, 2
    // Predicated region
    $region25: #{transformer_forward.4} parent=5 // pred_check
      %p150 = pneg %p149
    $region26: #{transformer_forward.4} parent=5 // pred_check_branch
      %152 = sbr.rel (%p150) target = $region28
    $region27: #{transformer_forward.4} parent=5 // pred_region
      // Predicated region
      $region29: #{transformer_forward.4} parent=27 // pred_check
        %p153 = pneg %p30
      $region30: #{transformer_forward.4} parent=27 // pred_check_branch
        %155 = sbr.rel (%p153) target = $region32
      $region31: #{transformer_forward.4} parent=27 // pred_region
        %p156 = scmp.lt.s32.totalorder %s10, 1
        %s157 = scalar_select %p156, %s10, 1
        %s158 = smul.addr %s157, 8
        %s159 = scalar_lea.vmem %s0, %s158
      $region32: #{transformer_forward.4} parent=27 // pred_fallthru
        _
    $region28: #{transformer_forward.4} parent=5 // pred_fallthru
      _
    %p160 = scmp.le.s32.totalorder 1, %s10
    %p161 = scmp.lt.s32.totalorder %s10, 3
    %p162 = pnand %p160, %p161
    %p163 = pneg %p162
    // Predicated region
    $region33: #{transformer_forward.4} parent=5 // pred_check
      _
    $region34: #{transformer_forward.4} parent=5 // pred_check_branch
      %165 = sbr.rel (%p162) target = $region36
    $region35: #{transformer_forward.4} parent=5 // pred_region
      %s166 = ssub.s32 %s10, 1
      %p167 = scmp.lt.s32.totalorder %s15, 1
      %s168 = scalar_select %p167, %s15, 1
      %s169 = smul.addr %s168, 8
      %s170 = scalar_lea.vmem %s0, %s169
      %p171 = pneg %p36
      %p172 = pneg %p33
      %p173 = pneg %p57
      %p174 = pneg %p54
      %p175 = pneg %p78
      %p176 = pneg %p75
      %p177 = pneg %p99
      %p178 = pneg %p96
      %p179 = pneg %p125
      %p180 = pneg %p122
      %p181 = scmp.lt.s32.totalorder %s15, 1
      %s182 = scalar_select %p181, %s15, 1
      %s183 = smul.addr %s182, 4
      %s184 = scalar_lea.vmem %s4, %s183
      %p185 = scmp.lt.s32.totalorder %s15, 1
      %s186 = scalar_select %p185, %s15, 1
      %s187 = smul.addr %s186, 8
      %s188 = scalar_lea.vmem %s0, %s187
      %p189 = scmp.lt.s32.totalorder %s15, 1
      %s190 = scalar_select %p189, %s15, 1
      %s191 = smul.addr %s190, 4
      %s192 = scalar_lea.vmem %s4, %s191
      %v194 = vld [vmem:[%s188] sm:$0xff]
      %v195 = vpack.c.bf16 %v194, %v194
      %v196 = vld [vmem:[%s1] sm:$0xf]
      %v197 = vld [vmem:[%s1 + $0x4] sm:$0xf]
      %v198 = vld [vmem:[%s2] sm:$0x1]
      %v200 = vlaneseq
      %v201 = vshrl.u32 %v200, 7
      %v202 = vsub.s32 0, %v201
      %v203 = vrot.slane %v198, %v202
      %v207 = vunpack.c.l.b16 %v196
      %v208 = vunpack.c.l.b16 %v197
      %v209 = vpack.c.b16 %v208, %v207
      %vm211 = vcmask 130048
      %v213 = vsel %vm211, %v195, 0
      %215 = vmatprep.subr.bf16.mxu0 0
      %216 = vmatpush1.bf16.msra.mxu0 %v209
      %217 = vmatprep.subr.bf16.mxu0 0
      %218 = vmatpush1.bf16.msra.mxu0 0
      %219 = vmatprep.subr.bf16.mxu0 0
      %220 = vmatpush1.bf16.msra.mxu0 0
      %221 = vmatprep.subr.bf16.mxu0 0
      %222 = vmatpush1.bf16.msra.mxu0 0
      %223 = vmatprep.subr.bf16.mxu0 0
      %224 = vmatpush1.bf16.msra.mxu0 0
      %225 = vmatprep.subr.bf16.mxu0 0
      %226 = vmatpush1.bf16.msra.mxu0 0
      %227 = vmatprep.subr.bf16.mxu0 0
      %228 = vmatpush1.bf16.msra.mxu0 0
      %229 = vmatprep.subr.bf16.mxu0 0
      %230 = vmatpush1.bf16.msra.mxu0 0
      %231 = vmatprep.subr.bf16.mxu0 0
      %232 = vmatpush1.bf16.msra.mxu0 0
      %233 = vmatprep.subr.bf16.mxu0 0
      %234 = vmatpush1.bf16.msra.mxu0 0
      %235 = vmatprep.subr.bf16.mxu0 0
      %236 = vmatpush1.bf16.msra.mxu0 0
      %237 = vmatprep.subr.bf16.mxu0 0
      %238 = vmatpush1.bf16.msra.mxu0 0
      %239 = vmatprep.subr.bf16.mxu0 0
      %240 = vmatpush1.bf16.msra.mxu0 0
      %241 = vmatprep.subr.bf16.mxu0 0
      %242 = vmatpush1.bf16.msra.mxu0 0
      %243 = vmatprep.subr.bf16.mxu0 0
      %244 = vmatpush1.bf16.msra.mxu0 0
      %245 = vmatprep.subr.bf16.mxu0 0
      %246 = vmatpush1.bf16.msra.mxu0 0
      %247 = vmatprep.mubr.bf16.mxu0 0
      %248 = vmatmul.mubr.bf16.gmra.mrb[0].mxu0 %v213
      %v249 = vpop.f32.mrb[0].mxu0
      %v250 = vadd.f32 %v203, %v249
      %v251 = vpop.f32.mrb[0].mxu0
      %v252 = vpop.f32.mrb[0].mxu0
      %v253 = vpop.f32.mrb[0].mxu0
      %254 = vdwg.mxu0
      %v255 = vld [vmem:[%s3] sm:$0xff]
      %v256 = vadd.f32 %v250, %v255
      %v257 = vpack.c.bf16 %v256, %v256
      %vm258 = vcmask 257024
      %259 = vst.msk [vmem:[%s192] sm:$0xf] %vm258, %v257
      %p260 = scmp.lt.s32.totalorder %s15, 1
      %s261 = scalar_select %p260, %s15, 1
      %s262 = smul.addr %s261, 4
      %s263 = scalar_lea.vmem %s4, %s262
      // Predicated region
      $region37: #{transformer_forward.4} parent=35 // pred_check
        %p264 = pneg %p122
      $region38: #{transformer_forward.4} parent=35 // pred_check_branch
        %266 = sbr.rel (%p264) target = $region40
      $region39: #{transformer_forward.4} parent=35 // pred_region
        _
      $region40: #{transformer_forward.4} parent=35 // pred_fallthru
        _
    $region36: #{transformer_forward.4} parent=5 // pred_fallthru
      _
    %p267 = scmp.le.s32.totalorder 2, %s10
    // Predicated region
    $region41: #{transformer_forward.4} parent=5 // pred_check
      %p268 = pneg %p267
    $region42: #{transformer_forward.4} parent=5 // pred_check_branch
      %270 = sbr.rel (%p268) target = $region44
    $region43: #{transformer_forward.4} parent=5 // pred_region
      %s271 = ssub.s32 %s10, 2
      // Predicated region
      $region45: #{transformer_forward.4} parent=43 // pred_check
        %p272 = pneg %p128
      $region46: #{transformer_forward.4} parent=43 // pred_check_branch
        %274 = sbr.rel (%p272) target = $region48
      $region47: #{transformer_forward.4} parent=43 // pred_region
        %p275 = scmp.lt.s32.totalorder %s16, 1
        %s276 = scalar_select %p275, %s16, 1
        %s277 = smul.addr %s276, 4
        %s278 = scalar_lea.vmem %s4, %s277
      $region48: #{transformer_forward.4} parent=43 // pred_fallthru
        _
    $region44: #{transformer_forward.4} parent=5 // pred_fallthru
      _
  $region6: #{transformer_forward.4} parent=0 // loop_footer
    %s14 = sadd.s32 1, %s10
  $region7: #{transformer_forward.4} parent=0 // loop_footer_branch
    %9 = sbr.rel target = $region3
  $region8: #{transformer_forward.4} parent=0 // loop_exit
    _

// kernel: transformer_forward.7
$region0: #{transformer_forward.7}
  #allocation0 [shape = 'u32[]', space=smem, size = 0x4, offset = 0x4, fixed_abs, tag = 'smem constant byte address 0x4 - core index']
  #allocation1 [shape = 'u32[144,128]{1,0:T(1,128)}', space=vmem, size = 0x12000, scoped, tag = 'internal scratch']
  #allocation2 [shape = 'f32[16,128]{1,0:T(8,128)}', space=vmem, size = 0x2000, scoped, tag = 'scratch operand']
  %s0 = inlined_call_operand.vmem [shape: bf16[16,32], index: 0, kind: input, shape index: {}]
  %s1 = inlined_call_operand.vmem [shape: bf16[32,128], index: 1, kind: input, shape index: {}]
  %s2 = inlined_call_operand.vmem [shape: f32[1,128], index: 2, kind: input, shape index: {}]
  %s3 = inlined_call_operand.vmem [shape: f32[16,128], index: 3, kind: output, shape index: {}]
  %s4 = sld [smem:[#allocation0]]
  $region30: #{transformer_forward.7} parent=0
    _
  %s6 = ssub.s32 1, %s4
  %s7 = scalar_select 0, %s6, %s4
  // Predicated region
  $region2: #{transformer_forward.7} parent=0 // pred_check
    _
  $region3: #{transformer_forward.7} parent=0 // pred_check_branch
    %9 = sbr.rel (0) target = $region5
  $region4: #{transformer_forward.7} parent=0 // pred_region
    _
  $region5: #{transformer_forward.7} parent=0 // pred_fallthru
    _
  // Predicated region
  $region6: #{transformer_forward.7} parent=0 // pred_check
    _
  $region7: #{transformer_forward.7} parent=0 // pred_check_branch
    %11 = sbr.rel (0) target = $region9
  $region8: #{transformer_forward.7} parent=0 // pred_region
    _
  $region9: #{transformer_forward.7} parent=0 // pred_fallthru
    _
  // Predicated region
  $region10: #{transformer_forward.7} parent=0 // pred_check
    _
  $region11: #{transformer_forward.7} parent=0 // pred_check_branch
    %13 = sbr.rel (0) target = $region13
  $region12: #{transformer_forward.7} parent=0 // pred_region
    _
  $region13: #{transformer_forward.7} parent=0 // pred_fallthru
    _
  %p15 = scmp.eq.s32.totalorder 0, 0
  // Predicated region
  $region14: #{transformer_forward.7} parent=0 // pred_check
    %p16 = pneg %p15
  $region15: #{transformer_forward.7} parent=0 // pred_check_branch
    %18 = sbr.rel (%p16) target = $region17
  $region16: #{transformer_forward.7} parent=0 // pred_region
    %19 = vst [vmem:[#allocation2] sm:$0xff] 0.0
    %20 = vst [vmem:[#allocation2 + $0x8] sm:$0xff] 0.0
  $region17: #{transformer_forward.7} parent=0 // pred_fallthru
    _
  %v21 = vld [vmem:[#allocation2] sm:$0xff]
  %v22 = vld [vmem:[#allocation2 + $0x8] sm:$0xff]
  %v23 = vld [vmem:[%s0] sm:$0xf]
  %v24 = vld [vmem:[%s0 + $0x4] sm:$0xf]
  %v25 = vld [vmem:[%s1] sm:$0xf]
  %v26 = vld [vmem:[%s1 + $0x4] sm:$0xf]
  %v27 = vld [vmem:[%s1 + $0x8] sm:$0xf]
  %v28 = vld [vmem:[%s1 + $0xc] sm:$0xf]
  %v31 = vunpack.c.l.b16 %v23
  %v32 = vunpack.c.l.b16 %v24
  %v33 = vpack.c.b16 %v32, %v31
  %v38 = vunpack.c.l.b16 %v25
  %v39 = vunpack.c.l.b16 %v26
  %v40 = vunpack.c.l.b16 %v27
  %v41 = vunpack.c.l.b16 %v28
  %v42 = vpack.c.b16 %v39, %v38
  %v43 = vpack.c.b16 %v41, %v40
  %vm46 = vcmask 261120
  %v48 = vsel %vm46, %v33, 0
  %50 = vmatprep.subr.bf16.mxu0 0
  %51 = vmatpush1.bf16.msra.mxu0 %v42
  %52 = vmatprep.subr.bf16.mxu0 0
  %53 = vmatpush1.bf16.msra.mxu0 %v43
  %54 = vmatprep.subr.bf16.mxu0 0
  %55 = vmatpush1.bf16.msra.mxu0 0
  %56 = vmatprep.subr.bf16.mxu0 0
  %57 = vmatpush1.bf16.msra.mxu0 0
  %58 = vmatprep.subr.bf16.mxu0 0
  %59 = vmatpush1.bf16.msra.mxu0 0
  %60 = vmatprep.subr.bf16.mxu0 0
  %61 = vmatpush1.bf16.msra.mxu0 0
  %62 = vmatprep.subr.bf16.mxu0 0
  %63 = vmatpush1.bf16.msra.mxu0 0
  %64 = vmatprep.subr.bf16.mxu0 0
  %65 = vmatpush1.bf16.msra.mxu0 0
  %66 = vmatprep.subr.bf16.mxu0 0
  %67 = vmatpush1.bf16.msra.mxu0 0
  %68 = vmatprep.subr.bf16.mxu0 0
  %69 = vmatpush1.bf16.msra.mxu0 0
  %70 = vmatprep.subr.bf16.mxu0 0
  %71 = vmatpush1.bf16.msra.mxu0 0
  %72 = vmatprep.subr.bf16.mxu0 0
  %73 = vmatpush1.bf16.msra.mxu0 0
  %74 = vmatprep.subr.bf16.mxu0 0
  %75 = vmatpush1.bf16.msra.mxu0 0
  %76 = vmatprep.subr.bf16.mxu0 0
  %77 = vmatpush1.bf16.msra.mxu0 0
  %78 = vmatprep.subr.bf16.mxu0 0
  %79 = vmatpush1.bf16.msra.mxu0 0
  %80 = vmatprep.subr.bf16.mxu0 0
  %81 = vmatpush1.bf16.msra.mxu0 0
  %82 = vmatprep.mubr.bf16.mxu0 0
  %83 = vmatmul.mubr.bf16.gmra.mrb[0].mxu0 %v48
  %v84 = vpop.f32.mrb[0].mxu0
  %v85 = vadd.f32 0.0, %v84
  %v86 = vpop.f32.mrb[0].mxu0
  %v87 = vpop.f32.mrb[0].mxu0
  %v88 = vadd.f32 0.0, %v87
  %v89 = vpop.f32.mrb[0].mxu0
  %90 = vdwg.mxu0
  %v91 = vadd.f32 %v21, %v85
  %v92 = vadd.f32 %v22, %v88
  %93 = vst [vmem:[#allocation2] sm:$0xff] %v91
  %94 = vst [vmem:[#allocation2 + $0x8] sm:$0xff] %v92
  // Predicated region
  $region18: #{transformer_forward.7} parent=0 // pred_check
    %p95 = pneg %p15
  $region19: #{transformer_forward.7} parent=0 // pred_check_branch
    %97 = sbr.rel (%p95) target = $region21
  $region20: #{transformer_forward.7} parent=0 // pred_region
    %v98 = vld [vmem:[#allocation2] sm:$0xff]
    %v99 = vld [vmem:[#allocation2 + $0x8] sm:$0xff]
    %v100 = vld [vmem:[%s2] sm:$0x1]
    %v102 = vlaneseq
    %v103 = vshrl.u32 %v102, 7
    %v104 = vsub.s32 0, %v103
    %v105 = vrot.slane %v100, %v104
    %v107 = vadd.f32 %v98, %v105
    %v108 = vadd.f32 %v99, %v105
    %109 = vst [vmem:[%s3] sm:$0xff] %v107
    %110 = vst [vmem:[%s3 + $0x8] sm:$0xff] %v108
  $region21: #{transformer_forward.7} parent=0 // pred_fallthru
    _
  // Predicated region
  $region22: #{transformer_forward.7} parent=0 // pred_check
    _
  $region23: #{transformer_forward.7} parent=0 // pred_check_branch
    %112 = sbr.rel (0) target = $region25
  $region24: #{transformer_forward.7} parent=0 // pred_region
    _
  $region25: #{transformer_forward.7} parent=0 // pred_fallthru
    _
  // Predicated region
  $region26: #{transformer_forward.7} parent=0 // pred_check
    _
  $region27: #{transformer_forward.7} parent=0 // pred_check_branch
    %114 = sbr.rel (0) target = $region29
  $region28: #{transformer_forward.7} parent=0 // pred_region
    _
  $region29: #{transformer_forward.7} parent=0 // pred_fallthru
    _

// kernel: transformer_forward.5
$region0: #{transformer_forward.5}
  #allocation0 [shape = 'u32[]', space=smem, size = 0x4, offset = 0x4, fixed_abs, tag = 'smem constant byte address 0x4 - core index']
  #allocation1 [shape = 'u32[144,128]{1,0:T(1,128)}', space=vmem, size = 0x12000, scoped, tag = 'internal scratch']
  %s0 = inlined_call_operand.vmem [shape: bf16[2,8,32], index: 0, kind: input, shape index: {}]
  %s1 = inlined_call_operand.vmem [shape: bf16[32,96], index: 1, kind: input, shape index: {}]
  %s2 = inlined_call_operand.vmem [shape: f32[1,96], index: 2, kind: input, shape index: {}]
  %s3 = inlined_call_operand.vmem [shape: bf16[32,32], index: 3, kind: input, shape index: {}]
  %s4 = inlined_call_operand.vmem [shape: f32[1,32], index: 4, kind: input, shape index: {}]
  %s5 = inlined_call_operand.vmem [shape: f32[1,32], index: 5, kind: input, shape index: {}]
  %s6 = inlined_call_operand.vmem [shape: f32[1,32], index: 6, kind: input, shape index: {}]
  %s7 = inlined_call_operand.vmem [shape: bf16[32,32], index: 7, kind: input, shape index: {}]
  %s8 = inlined_call_operand.vmem [shape: f32[1,32], index: 8, kind: input, shape index: {}]
  %s9 = inlined_call_operand.vmem [shape: bf16[32,32], index: 9, kind: input, shape index: {}]
  %s10 = inlined_call_operand.vmem [shape: f32[1,32], index: 10, kind: input, shape index: {}]
  %s11 = inlined_call_operand.vmem [shape: f32[1,32], index: 11, kind: input, shape index: {}]
  %s12 = inlined_call_operand.vmem [shape: f32[1,32], index: 12, kind: input, shape index: {}]
  %s13 = inlined_call_operand.vmem [shape: bf16[2,8,32], index: 13, kind: output, shape index: {}]
  %s14 = sld [smem:[#allocation0]]
  $region85: #{transformer_forward.5} parent=0
    _
  %s16 = ssub.s32 1, %s14
  %s17 = scalar_select 0, %s16, %s14
  loop: start=0, step=1, limit=4
  $region2: #{transformer_forward.5} parent=0 // loop_pre_header
    _
  $region3: #{transformer_forward.5} parent=0 // loop_header
    %s19 = sphi 0, %s23
    %p20 = scmp.ge.s32.totalorder %s19, 4
    %s29 = sphi 0, %s31
    %s32 = sphi 0, %s29
    %s33 = sphi 0, %s32
    %s49 = sphi 0, %s33
    %s53 = sphi 0, %s53
    %s55 = sphi 0, %s53
    %s56 = sphi 0, %s55
    %s70 = sphi 0, %s56
    %s74 = sphi 0, %s74
    %s76 = sphi 0, %s74
    %s77 = sphi 0, %s76
    %s91 = sphi 0, %s77
    %s95 = sphi 0, %s95
    %s97 = sphi 0, %s95
    %s98 = sphi 0, %s97
    %s112 = sphi 0, %s98
    %s116 = sphi 0, %s116
    %s118 = sphi 0, %s116
    %s119 = sphi 0, %s118
    %s133 = sphi 0, %s119
    %s137 = sphi 0, %s137
    %s139 = sphi 0, %s137
    %s140 = sphi 0, %s139
    %s154 = sphi 0, %s140
    %s158 = sphi 0, %s158
    %s160 = sphi 0, %s158
    %s161 = sphi 0, %s160
    %s175 = sphi 0, %s161
    %s179 = sphi 0, %s179
    %s181 = sphi 0, %s179
    %s182 = sphi 0, %s181
    %s196 = sphi 0, %s182
    %s200 = sphi 0, %s200
    %s202 = sphi 0, %s200
    %s203 = sphi 0, %s202
    %s217 = sphi 0, %s203
    %s221 = sphi 0, %s221
    %s223 = sphi 0, %s221
    %s224 = sphi 0, %s223
    %s238 = sphi 0, %s224
    %s242 = sphi 0, %s242
    %s244 = sphi 0, %s242
    %s245 = sphi 0, %s244
    %s259 = sphi 0, %s245
    %s263 = sphi 0, %s263
    %s265 = sphi 0, %s263
    %s266 = sphi 0, %s265
    %s280 = sphi 0, %s266
    %s284 = sphi 0, %s284
    %s286 = sphi 0, %s284
    %s287 = sphi 0, %s286
    %s301 = sphi 0, %s287
    %s307 = sphi 0, %s309
    %s310 = sphi 0, %s307
    %s311 = sphi 0, %s310
    %s327 = sphi 0, %s311
  $region4: #{transformer_forward.5} parent=0 // loop_header_branch
    %22 = sbr.rel (%p20) target = $region8
  $region5: #{transformer_forward.5} parent=0 // loop_body
    %s24 = ssub.s32 %s19, 1
    %s25 = ssub.s32 %s19, 2
    %s26 = sadd.s32 %s19, 1
    %s27 = ssub.s32 %s19, %s26
    %p28 = scmp.eq.s32.totalorder %s27, 0
    %s30 = sadd.s32 %s29, 1
    %s31 = scalar_select %p28, %s29, %s30
    %p34 = pneg %p28
    %p35 = scmp.eq.s32.totalorder %s19, 1
    %p36 = por %p34, %p35
    %p37 = scmp.ne.s32.totalorder %s29, %s32
    %p38 = scmp.eq.s32.totalorder %s19, 0
    %p39 = por %p37, %p38
    %p40 = scmp.ne.s32.totalorder %s29, %s32
    %p41 = scmp.eq.s32.totalorder %s24, 1
    %p42 = por %p40, %p41
    %p43 = scmp.ne.s32.totalorder %s32, %s33
    %p44 = scmp.eq.s32.totalorder %s24, 0
    %p45 = por %p43, %p44
    %p46 = scmp.ne.s32.totalorder %s32, %s33
    %p47 = scmp.eq.s32.totalorder %s25, 1
    %p48 = por %p46, %p47
    %p50 = scmp.ne.s32.totalorder %s33, %s49
    %p51 = scmp.eq.s32.totalorder %s25, 0
    %p52 = por %p50, %p51
    %s54 = sadd.s32 %s53, 1
    %p57 = scmp.eq.s32.totalorder %s19, 1
    %p58 = scmp.ne.s32.totalorder %s53, %s55
    %p59 = scmp.eq.s32.totalorder %s19, 0
    %p60 = por %p58, %p59
    %p61 = scmp.ne.s32.totalorder %s53, %s55
    %p62 = scmp.eq.s32.totalorder %s24, 1
    %p63 = por %p61, %p62
    %p64 = scmp.ne.s32.totalorder %s55, %s56
    %p65 = scmp.eq.s32.totalorder %s24, 0
    %p66 = por %p64, %p65
    %p67 = scmp.ne.s32.totalorder %s55, %s56
    %p68 = scmp.eq.s32.totalorder %s25, 1
    %p69 = por %p67, %p68
    %p71 = scmp.ne.s32.totalorder %s56, %s70
    %p72 = scmp.eq.s32.totalorder %s25, 0
    %p73 = por %p71, %p72
    %s75 = sadd.s32 %s74, 1
    %p78 = scmp.eq.s32.totalorder %s19, 1
    %p79 = scmp.ne.s32.totalorder %s74, %s76
    %p80 = scmp.eq.s32.totalorder %s19, 0
    %p81 = por %p79, %p80
    %p82 = scmp.ne.s32.totalorder %s74, %s76
    %p83 = scmp.eq.s32.totalorder %s24, 1
    %p84 = por %p82, %p83
    %p85 = scmp.ne.s32.totalorder %s76, %s77
    %p86 = scmp.eq.s32.totalorder %s24, 0
    %p87 = por %p85, %p86
    %p88 = scmp.ne.s32.totalorder %s76, %s77
    %p89 = scmp.eq.s32.totalorder %s25, 1
    %p90 = por %p88, %p89
    %p92 = scmp.ne.s32.totalorder %s77, %s91
    %p93 = scmp.eq.s32.totalorder %s25, 0
    %p94 = por %p92, %p93
    %s96 = sadd.s32 %s95, 1
    %p99 = scmp.eq.s32.totalorder %s19, 1
    %p100 = scmp.ne.s32.totalorder %s95, %s97
    %p101 = scmp.eq.s32.totalorder %s19, 0
    %p102 = por %p100, %p101
    %p103 = scmp.ne.s32.totalorder %s95, %s97
    %p104 = scmp.eq.s32.totalorder %s24, 1
    %p105 = por %p103, %p104
    %p106 = scmp.ne.s32.totalorder %s97, %s98
    %p107 = scmp.eq.s32.totalorder %s24, 0
    %p108 = por %p106, %p107
    %p109 = scmp.ne.s32.totalorder %s97, %s98
    %p110 = scmp.eq.s32.totalorder %s25, 1
    %p111 = por %p109, %p110
    %p113 = scmp.ne.s32.totalorder %s98, %s112
    %p114 = scmp.eq.s32.totalorder %s25, 0
    %p115 = por %p113, %p114
    %s117 = sadd.s32 %s116, 1
    %p120 = scmp.eq.s32.totalorder %s19, 1
    %p121 = scmp.ne.s32.totalorder %s116, %s118
    %p122 = scmp.eq.s32.totalorder %s19, 0
    %p123 = por %p121, %p122
    %p124 = scmp.ne.s32.totalorder %s116, %s118
    %p125 = scmp.eq.s32.totalorder %s24, 1
    %p126 = por %p124, %p125
    %p127 = scmp.ne.s32.totalorder %s118, %s119
    %p128 = scmp.eq.s32.totalorder %s24, 0
    %p129 = por %p127, %p128
    %p130 = scmp.ne.s32.totalorder %s118, %s119
    %p131 = scmp.eq.s32.totalorder %s25, 1
    %p132 = por %p130, %p131
    %p134 = scmp.ne.s32.totalorder %s119, %s133
    %p135 = scmp.eq.s32.totalorder %s25, 0
    %p136 = por %p134, %p135
    %s138 = sadd.s32 %s137, 1
    %p141 = scmp.eq.s32.totalorder %s19, 1
    %p142 = scmp.ne.s32.totalorder %s137, %s139
    %p143 = scmp.eq.s32.totalorder %s19, 0
    %p144 = por %p142, %p143
    %p145 = scmp.ne.s32.totalorder %s137, %s139
    %p146 = scmp.eq.s32.totalorder %s24, 1
    %p147 = por %p145, %p146
    %p148 = scmp.ne.s32.totalorder %s139, %s140
    %p149 = scmp.eq.s32.totalorder %s24, 0
    %p150 = por %p148, %p149
    %p151 = scmp.ne.s32.totalorder %s139, %s140
    %p152 = scmp.eq.s32.totalorder %s25, 1
    %p153 = por %p151, %p152
    %p155 = scmp.ne.s32.totalorder %s140, %s154
    %p156 = scmp.eq.s32.totalorder %s25, 0
    %p157 = por %p155, %p156
    %s159 = sadd.s32 %s158, 1
    %p162 = scmp.eq.s32.totalorder %s19, 1
    %p163 = scmp.ne.s32.totalorder %s158, %s160
    %p164 = scmp.eq.s32.totalorder %s19, 0
    %p165 = por %p163, %p164
    %p166 = scmp.ne.s32.totalorder %s158, %s160
    %p167 = scmp.eq.s32.totalorder %s24, 1
    %p168 = por %p166, %p167
    %p169 = scmp.ne.s32.totalorder %s160, %s161
    %p170 = scmp.eq.s32.totalorder %s24, 0
    %p171 = por %p169, %p170
    %p172 = scmp.ne.s32.totalorder %s160, %s161
    %p173 = scmp.eq.s32.totalorder %s25, 1
    %p174 = por %p172, %p173
    %p176 = scmp.ne.s32.totalorder %s161, %s175
    %p177 = scmp.eq.s32.totalorder %s25, 0
    %p178 = por %p176, %p177
    %s180 = sadd.s32 %s179, 1
    %p183 = scmp.eq.s32.totalorder %s19, 1
    %p184 = scmp.ne.s32.totalorder %s179, %s181
    %p185 = scmp.eq.s32.totalorder %s19, 0
    %p186 = por %p184, %p185
    %p187 = scmp.ne.s32.totalorder %s179, %s181
    %p188 = scmp.eq.s32.totalorder %s24, 1
    %p189 = por %p187, %p188
    %p190 = scmp.ne.s32.totalorder %s181, %s182
    %p191 = scmp.eq.s32.totalorder %s24, 0
    %p192 = por %p190, %p191
    %p193 = scmp.ne.s32.totalorder %s181, %s182
    %p194 = scmp.eq.s32.totalorder %s25, 1
    %p195 = por %p193, %p194
    %p197 = scmp.ne.s32.totalorder %s182, %s196
    %p198 = scmp.eq.s32.totalorder %s25, 0
    %p199 = por %p197, %p198
    %s201 = sadd.s32 %s200, 1
    %p204 = scmp.eq.s32.totalorder %s19, 1
    %p205 = scmp.ne.s32.totalorder %s200, %s202
    %p206 = scmp.eq.s32.totalorder %s19, 0
    %p207 = por %p205, %p206
    %p208 = scmp.ne.s32.totalorder %s200, %s202
    %p209 = scmp.eq.s32.totalorder %s24, 1
    %p210 = por %p208, %p209
    %p211 = scmp.ne.s32.totalorder %s202, %s203
    %p212 = scmp.eq.s32.totalorder %s24, 0
    %p213 = por %p211, %p212
    %p214 = scmp.ne.s32.totalorder %s202, %s203
    %p215 = scmp.eq.s32.totalorder %s25, 1
    %p216 = por %p214, %p215
    %p218 = scmp.ne.s32.totalorder %s203, %s217
    %p219 = scmp.eq.s32.totalorder %s25, 0
    %p220 = por %p218, %p219
    %s222 = sadd.s32 %s221, 1
    %p225 = scmp.eq.s32.totalorder %s19, 1
    %p226 = scmp.ne.s32.totalorder %s221, %s223
    %p227 = scmp.eq.s32.totalorder %s19, 0
    %p228 = por %p226, %p227
    %p229 = scmp.ne.s32.totalorder %s221, %s223
    %p230 = scmp.eq.s32.totalorder %s24, 1
    %p231 = por %p229, %p230
    %p232 = scmp.ne.s32.totalorder %s223, %s224
    %p233 = scmp.eq.s32.totalorder %s24, 0
    %p234 = por %p232, %p233
    %p235 = scmp.ne.s32.totalorder %s223, %s224
    %p236 = scmp.eq.s32.totalorder %s25, 1
    %p237 = por %p235, %p236
    %p239 = scmp.ne.s32.totalorder %s224, %s238
    %p240 = scmp.eq.s32.totalorder %s25, 0
    %p241 = por %p239, %p240
    %s243 = sadd.s32 %s242, 1
    %p246 = scmp.eq.s32.totalorder %s19, 1
    %p247 = scmp.ne.s32.totalorder %s242, %s244
    %p248 = scmp.eq.s32.totalorder %s19, 0
    %p249 = por %p247, %p248
    %p250 = scmp.ne.s32.totalorder %s242, %s244
    %p251 = scmp.eq.s32.totalorder %s24, 1
    %p252 = por %p250, %p251
    %p253 = scmp.ne.s32.totalorder %s244, %s245
    %p254 = scmp.eq.s32.totalorder %s24, 0
    %p255 = por %p253, %p254
    %p256 = scmp.ne.s32.totalorder %s244, %s245
    %p257 = scmp.eq.s32.totalorder %s25, 1
    %p258 = por %p256, %p257
    %p260 = scmp.ne.s32.totalorder %s245, %s259
    %p261 = scmp.eq.s32.totalorder %s25, 0
    %p262 = por %p260, %p261
    %s264 = sadd.s32 %s263, 1
    %p267 = scmp.eq.s32.totalorder %s19, 1
    %p268 = scmp.ne.s32.totalorder %s263, %s265
    %p269 = scmp.eq.s32.totalorder %s19, 0
    %p270 = por %p268, %p269
    %p271 = scmp.ne.s32.totalorder %s263, %s265
    %p272 = scmp.eq.s32.totalorder %s24, 1
    %p273 = por %p271, %p272
    %p274 = scmp.ne.s32.totalorder %s265, %s266
    %p275 = scmp.eq.s32.totalorder %s24, 0
    %p276 = por %p274, %p275
    %p277 = scmp.ne.s32.totalorder %s265, %s266
    %p278 = scmp.eq.s32.totalorder %s25, 1
    %p279 = por %p277, %p278
    %p281 = scmp.ne.s32.totalorder %s266, %s280
    %p282 = scmp.eq.s32.totalorder %s25, 0
    %p283 = por %p281, %p282
    %s285 = sadd.s32 %s284, 1
    %p288 = scmp.eq.s32.totalorder %s19, 1
    %p289 = scmp.ne.s32.totalorder %s284, %s286
    %p290 = scmp.eq.s32.totalorder %s19, 0
    %p291 = por %p289, %p290
    %p292 = scmp.ne.s32.totalorder %s284, %s286
    %p293 = scmp.eq.s32.totalorder %s24, 1
    %p294 = por %p292, %p293
    %p295 = scmp.ne.s32.totalorder %s286, %s287
    %p296 = scmp.eq.s32.totalorder %s24, 0
    %p297 = por %p295, %p296
    %p298 = scmp.ne.s32.totalorder %s286, %s287
    %p299 = scmp.eq.s32.totalorder %s25, 1
    %p300 = por %p298, %p299
    %p302 = scmp.ne.s32.totalorder %s287, %s301
    %p303 = scmp.eq.s32.totalorder %s25, 0
    %p304 = por %p302, %p303
    %s305 = ssub.s32 %s19, %s26
    %p306 = scmp.eq.s32.totalorder %s305, 0
    %s308 = sadd.s32 %s307, 1
    %s309 = scalar_select %p306, %s307, %s308
    %p312 = pneg %p306
    %p313 = scmp.eq.s32.totalorder %s19, 1
    %p314 = por %p312, %p313
    %p315 = scmp.ne.s32.totalorder %s307, %s310
    %p316 = scmp.eq.s32.totalorder %s19, 0
    %p317 = por %p315, %p316
    %p318 = scmp.ne.s32.totalorder %s307, %s310
    %p319 = scmp.eq.s32.totalorder %s24, 1
    %p320 = por %p318, %p319
    %p321 = scmp.ne.s32.totalorder %s310, %s311
    %p322 = scmp.eq.s32.totalorder %s24, 0
    %p323 = por %p321, %p322
    %p324 = scmp.ne.s32.totalorder %s310, %s311
    %p325 = scmp.eq.s32.totalorder %s25, 1
    %p326 = por %p324, %p325
    %p328 = scmp.ne.s32.totalorder %s311, %s327
    %p329 = scmp.eq.s32.totalorder %s25, 0
    %p330 = por %p328, %p329
    %p331 = scmp.le.s32.totalorder 1, %s19
    %p332 = scmp.lt.s32.totalorder %s19, 3
    %p333 = pnand %p331, %p332
    %p334 = pneg %p333
    // Predicated region
    $region9: #{transformer_forward.5} parent=5 // pred_check
      _
    $region10: #{transformer_forward.5} parent=5 // pred_check_branch
      %336 = sbr.rel (%p333) target = $region12
    $region11: #{transformer_forward.5} parent=5 // pred_region
      %s337 = ssub.s32 %s19, 1
      // Predicated region
      $region13: #{transformer_forward.5} parent=11 // pred_check
        %p338 = pneg %p66
      $region14: #{transformer_forward.5} parent=11 // pred_check_branch
        %340 = sbr.rel (%p338) target = $region16
      $region15: #{transformer_forward.5} parent=11 // pred_region
        _
      $region16: #{transformer_forward.5} parent=11 // pred_fallthru
        _
      // Predicated region
      $region17: #{transformer_forward.5} parent=11 // pred_check
        %p341 = pneg %p87
      $region18: #{transformer_forward.5} parent=11 // pred_check_branch
        %343 = sbr.rel (%p341) target = $region20
      $region19: #{transformer_forward.5} parent=11 // pred_region
        _
      $region20: #{transformer_forward.5} parent=11 // pred_fallthru
        _
      // Predicated region
      $region21: #{transformer_forward.5} parent=11 // pred_check
        %p344 = pneg %p108
      $region22: #{transformer_forward.5} parent=11 // pred_check_branch
        %346 = sbr.rel (%p344) target = $region24
      $region23: #{transformer_forward.5} parent=11 // pred_region
        _
      $region24: #{transformer_forward.5} parent=11 // pred_fallthru
        _
      // Predicated region
      $region25: #{transformer_forward.5} parent=11 // pred_check
        %p347 = pneg %p129
      $region26: #{transformer_forward.5} parent=11 // pred_check_branch
        %349 = sbr.rel (%p347) target = $region28
      $region27: #{transformer_forward.5} parent=11 // pred_region
        _
      $region28: #{transformer_forward.5} parent=11 // pred_fallthru
        _
      // Predicated region
      $region29: #{transformer_forward.5} parent=11 // pred_check
        %p350 = pneg %p150
      $region30: #{transformer_forward.5} parent=11 // pred_check_branch
        %352 = sbr.rel (%p350) target = $region32
      $region31: #{transformer_forward.5} parent=11 // pred_region
        _
      $region32: #{transformer_forward.5} parent=11 // pred_fallthru
        _
      // Predicated region
      $region33: #{transformer_forward.5} parent=11 // pred_check
        %p353 = pneg %p171
      $region34: #{transformer_forward.5} parent=11 // pred_check_branch
        %355 = sbr.rel (%p353) target = $region36
      $region35: #{transformer_forward.5} parent=11 // pred_region
        _
      $region36: #{transformer_forward.5} parent=11 // pred_fallthru
        _
      // Predicated region
      $region37: #{transformer_forward.5} parent=11 // pred_check
        %p356 = pneg %p192
      $region38: #{transformer_forward.5} parent=11 // pred_check_branch
        %358 = sbr.rel (%p356) target = $region40
      $region39: #{transformer_forward.5} parent=11 // pred_region
        _
      $region40: #{transformer_forward.5} parent=11 // pred_fallthru
        _
      // Predicated region
      $region41: #{transformer_forward.5} parent=11 // pred_check
        %p359 = pneg %p213
      $region42: #{transformer_forward.5} parent=11 // pred_check_branch
        %361 = sbr.rel (%p359) target = $region44
      $region43: #{transformer_forward.5} parent=11 // pred_region
        _
      $region44: #{transformer_forward.5} parent=11 // pred_fallthru
        _
      // Predicated region
      $region45: #{transformer_forward.5} parent=11 // pred_check
        %p362 = pneg %p234
      $region46: #{transformer_forward.5} parent=11 // pred_check_branch
        %364 = sbr.rel (%p362) target = $region48
      $region47: #{transformer_forward.5} parent=11 // pred_region
        _
      $region48: #{transformer_forward.5} parent=11 // pred_fallthru
        _
      // Predicated region
      $region49: #{transformer_forward.5} parent=11 // pred_check
        %p365 = pneg %p255
      $region50: #{transformer_forward.5} parent=11 // pred_check_branch
        %367 = sbr.rel (%p365) target = $region52
      $region51: #{transformer_forward.5} parent=11 // pred_region
        _
      $region52: #{transformer_forward.5} parent=11 // pred_fallthru
        _
      // Predicated region
      $region53: #{transformer_forward.5} parent=11 // pred_check
        %p368 = pneg %p276
      $region54: #{transformer_forward.5} parent=11 // pred_check_branch
        %370 = sbr.rel (%p368) target = $region56
      $region55: #{transformer_forward.5} parent=11 // pred_region
        _
      $region56: #{transformer_forward.5} parent=11 // pred_fallthru
        _
      // Predicated region
      $region57: #{transformer_forward.5} parent=11 // pred_check
        %p371 = pneg %p297
      $region58: #{transformer_forward.5} parent=11 // pred_check_branch
        %373 = sbr.rel (%p371) target = $region60
      $region59: #{transformer_forward.5} parent=11 // pred_region
        _
      $region60: #{transformer_forward.5} parent=11 // pred_fallthru
        _
    $region12: #{transformer_forward.5} parent=5 // pred_fallthru
      _
    %p374 = scmp.lt.s32.totalorder %s19, 2
    // Predicated region
    $region61: #{transformer_forward.5} parent=5 // pred_check
      %p375 = pneg %p374
    $region62: #{transformer_forward.5} parent=5 // pred_check_branch
      %377 = sbr.rel (%p375) target = $region64
    $region63: #{transformer_forward.5} parent=5 // pred_region
      // Predicated region
      $region65: #{transformer_forward.5} parent=63 // pred_check
        %p378 = pneg %p39
      $region66: #{transformer_forward.5} parent=63 // pred_check_branch
        %380 = sbr.rel (%p378) target = $region68
      $region67: #{transformer_forward.5} parent=63 // pred_region
        %p381 = scmp.lt.s32.totalorder %s19, 1
        %s382 = scalar_select %p381, %s19, 1
        %s383 = smul.addr %s382, 4
        %s384 = scalar_lea.vmem %s0, %s383
      $region68: #{transformer_forward.5} parent=63 // pred_fallthru
        _
    $region64: #{transformer_forward.5} parent=5 // pred_fallthru
      _
    %p385 = scmp.le.s32.totalorder 1, %s19
    %p386 = scmp.lt.s32.totalorder %s19, 3
    %p387 = pnand %p385, %p386
    %p388 = pneg %p387
    // Predicated region
    $region69: #{transformer_forward.5} parent=5 // pred_check
      _
    $region70: #{transformer_forward.5} parent=5 // pred_check_branch
      %390 = sbr.rel (%p387) target = $region72
    $region71: #{transformer_forward.5} parent=5 // pred_region
      %s391 = ssub.s32 %s19, 1
      %p392 = scmp.lt.s32.totalorder %s24, 1
      %s393 = scalar_select %p392, %s24, 1
      %s394 = smul.addr %s393, 4
      %s395 = scalar_lea.vmem %s0, %s394
      %p396 = pneg %p45
      %p397 = pneg %p42
      %p398 = pneg %p66
      %p399 = pneg %p63
      %p400 = pneg %p87
      %p401 = pneg %p84
      %p402 = pneg %p108
      %p403 = pneg %p105
      %p404 = pneg %p129
      %p405 = pneg %p126
      %p406 = pneg %p150
      %p407 = pneg %p147
      %p408 = pneg %p171
      %p409 = pneg %p168
      %p410 = pneg %p192
      %p411 = pneg %p189
      %p412 = pneg %p213
      %p413 = pneg %p210
      %p414 = pneg %p234
      %p415 = pneg %p231
      %p416 = pneg %p255
      %p417 = pneg %p252
      %p418 = pneg %p276
      %p419 = pneg %p273
      %p420 = pneg %p297
      %p421 = pneg %p294
      %p422 = pneg %p323
      %p423 = pneg %p320
      %p424 = scmp.lt.s32.totalorder %s24, 1
      %s425 = scalar_select %p424, %s24, 1
      %s426 = smul.addr %s425, 4
      %s427 = scalar_lea.vmem %s13, %s426
      %p428 = scmp.lt.s32.totalorder %s24, 1
      %s429 = scalar_select %p428, %s24, 1
      %s430 = smul.addr %s429, 4
      %s431 = scalar_lea.vmem %s0, %s430
      %p432 = scmp.lt.s32.totalorder %s24, 1
      %s433 = scalar_select %p432, %s24, 1
      %s434 = smul.addr %s433, 4
      %s435 = scalar_lea.vmem %s13, %s434
      %v437 = vld [vmem:[%s431] sm:$0xf]
      %v438 = vunpack.c.l.bf16 %v437
      %v439 = vld [vmem:[%s1] sm:$0xf]
      %v440 = vld [vmem:[%s1 + $0x4] sm:$0xf]
      %v441 = vld [vmem:[%s1 + $0x8] sm:$0xf]
      %v442 = vld [vmem:[%s1 + $0xc] sm:$0xf]
      %v443 = vld [vmem:[%s2] sm:$0x1]
      %v445 = vlaneseq
      %v446 = vshrl.u32 %v445, 7
      %v447 = vsub.s32 0, %v446
      %v448 = vrot.slane %v443, %v447
      %v454 = vunpack.c.l.b16 %v439
      %v455 = vunpack.c.l.b16 %v440
      %v456 = vunpack.c.l.b16 %v441
      %v457 = vunpack.c.l.b16 %v442
      %v458 = vpack.c.b16 %v455, %v454
      %v459 = vpack.c.b16 %v457, %v456
      %vm462 = vcmask 261120
      %v464 = vsel %vm462, %v437, 0
      %466 = vmatprep.subr.bf16.mxu0 0
      %467 = vmatpush1.bf16.msra.mxu0 %v458
      %468 = vmatprep.subr.bf16.mxu0 0
      %469 = vmatpush1.bf16.msra.mxu0 %v459
      %470 = vmatprep.subr.bf16.mxu0 0
      %471 = vmatpush1.bf16.msra.mxu0 0
      %472 = vmatprep.subr.bf16.mxu0 0
      %473 = vmatpush1.bf16.msra.mxu0 0
      %474 = vmatprep.subr.bf16.mxu0 0
      %475 = vmatpush1.bf16.msra.mxu0 0
      %476 = vmatprep.subr.bf16.mxu0 0
      %477 = vmatpush1.bf16.msra.mxu0 0
      %478 = vmatprep.subr.bf16.mxu0 0
      %479 = vmatpush1.bf16.msra.mxu0 0
      %480 = vmatprep.subr.bf16.mxu0 0
      %481 = vmatpush1.bf16.msra.mxu0 0
      %482 = vmatprep.subr.bf16.mxu0 0
      %483 = vmatpush1.bf16.msra.mxu0 0
      %484 = vmatprep.subr.bf16.mxu0 0
      %485 = vmatpush1.bf16.msra.mxu0 0
      %486 = vmatprep.subr.bf16.mxu0 0
      %487 = vmatpush1.bf16.msra.mxu0 0
      %488 = vmatprep.subr.bf16.mxu0 0
      %489 = vmatpush1.bf16.msra.mxu0 0
      %490 = vmatprep.subr.bf16.mxu0 0
      %491 = vmatpush1.bf16.msra.mxu0 0
      %492 = vmatprep.subr.bf16.mxu0 0
      %493 = vmatpush1.bf16.msra.mxu0 0
      %494 = vmatprep.subr.bf16.mxu0 0
      %495 = vmatpush1.bf16.msra.mxu0 0
      %496 = vmatprep.subr.bf16.mxu0 0
      %497 = vmatpush1.bf16.msra.mxu0 0
      %498 = vmatprep.mubr.bf16.mxu0 0
      %499 = vmatmul.mubr.bf16.gmra.mrb[0].mxu0 %v464
      %v500 = vpop.f32.mrb[0].mxu0
      %v501 = vadd.f32 %v448, %v500
      %v502 = vpop.f32.mrb[0].mxu0
      %v503 = vpop.f32.mrb[0].mxu0
      %v504 = vpop.f32.mrb[0].mxu0
      %505 = vdwg.mxu0
      %v506 = vpack.c.bf16 %v501, %v501
      %508 = vrot.lane.b32.xlu0 %v506, 96
      %v509 = vpop.permute.xlu0 %508
      %vm510 = vcmask 64512
      %v512 = vsel %vm510, %v506, 0
      %v515 = vsel %vm510, %v509, 0
      %517 = vmatprep.subr.bf16.mxu0 0
      %518 = vmatpush1.bf16.xpose.msra.mxu0 %v515
      %519 = vmatprep.subr.bf16.mxu0 0
      %520 = vmatpush1.bf16.xpose.msra.mxu0 0
      %521 = vmatprep.subr.bf16.mxu0 0
      %522 = vmatpush1.bf16.xpose.msra.mxu0 0
      %523 = vmatprep.subr.bf16.mxu0 0
      %524 = vmatpush1.bf16.xpose.msra.mxu0 0
      %525 = vmatprep.subr.bf16.mxu0 0
      %526 = vmatpush1.bf16.xpose.msra.mxu0 0
      %527 = vmatprep.subr.bf16.mxu0 0
      %528 = vmatpush1.bf16.xpose.msra.mxu0 0
      %529 = vmatprep.subr.bf16.mxu0 0
      %530 = vmatpush1.bf16.xpose.msra.mxu0 0
      %531 = vmatprep.subr.bf16.mxu0 0
      %532 = vmatpush1.bf16.xpose.msra.mxu0 0
      %533 = vmatprep.subr.bf16.mxu0 0
      %534 = vmatpush1.bf16.xpose.msra.mxu0 0
      %535 = vmatprep.subr.bf16.mxu0 0
      %536 = vmatpush1.bf16.xpose.msra.mxu0 0
      %537 = vmatprep.subr.bf16.mxu0 0
      %538 = vmatpush1.bf16.xpose.msra.mxu0 0
      %539 = vmatprep.subr.bf16.mxu0 0
      %540 = vmatpush1.bf16.xpose.msra.mxu0 0
      %541 = vmatprep.subr.bf16.mxu0 0
      %542 = vmatpush1.bf16.xpose.msra.mxu0 0
      %543 = vmatprep.subr.bf16.mxu0 0
      %544 = vmatpush1.bf16.xpose.msra.mxu0 0
      %545 = vmatprep.subr.bf16.mxu0 0
      %546 = vmatpush1.bf16.xpose.msra.mxu0 0
      %547 = vmatprep.subr.bf16.mxu0 0
      %548 = vmatpush1.bf16.xpose.msra.mxu0 0
      %549 = vmatprep.mubr.bf16.mxu0 0
      %550 = vmatmul.mubr.bf16.gmra.mrb[0].mxu0 %v512
      %v551 = vpop.f32.mrb[0].mxu0
      %v552 = vadd.f32 0.0, %v551
      %v553 = vpop.f32.mrb[0].mxu0
      %v554 = vpop.f32.mrb[0].mxu0
      %v555 = vpop.f32.mrb[0].mxu0
      %556 = vdwg.mxu0
      %v557 = vmul.f32 %v552, 0.35355338
      %v558 = vsel %vm510, %v557, -inf
      %559 = vmax.xlane.f32.xlu0 %v558
      %v560 = vpop.xlane.xlu0 %559
      %v561 = vsub.f32 %v557, %v560
      %v562 = vmul.f32 %v561, 1.442695
      %v563 = vpow.pop %v562
      %v564 = vsel %vm510, %v563, 0.0
      %565 = vadd.xlane.f32.xlu0 %v564
      %v566 = vpop.xlane.xlu0 %565
      %v567 = vrcp.pop %v566
      %v568 = vmul.f32 %v563, %v567
      %v569 = vpack.c.bf16 %v568, %v568
      %570 = vrot.lane.b32.xlu0 %v506, 64
      %v571 = vpop.permute.xlu0 %570
      %v573 = vsel %vm510, %v569, 0
      %vm575 = vcmask 1043456
      %v577 = vsel %vm575, %v571, 0
      %579 = vmatprep.subr.bf16.mxu0 0
      %580 = vmatpush1.bf16.msra.mxu0 %v577
      %581 = vmatprep.subr.bf16.mxu0 0
      %582 = vmatpush1.bf16.msra.mxu0 0
      %583 = vmatprep.subr.bf16.mxu0 0
      %584 = vmatpush1.bf16.msra.mxu0 0
      %585 = vmatprep.subr.bf16.mxu0 0
      %586 = vmatpush1.bf16.msra.mxu0 0
      %587 = vmatprep.subr.bf16.mxu0 0
      %588 = vmatpush1.bf16.msra.mxu0 0
      %589 = vmatprep.subr.bf16.mxu0 0
      %590 = vmatpush1.bf16.msra.mxu0 0
      %591 = vmatprep.subr.bf16.mxu0 0
      %592 = vmatpush1.bf16.msra.mxu0 0
      %593 = vmatprep.subr.bf16.mxu0 0
      %594 = vmatpush1.bf16.msra.mxu0 0
      %595 = vmatprep.subr.bf16.mxu0 0
      %596 = vmatpush1.bf16.msra.mxu0 0
      %597 = vmatprep.subr.bf16.mxu0 0
      %598 = vmatpush1.bf16.msra.mxu0 0
      %599 = vmatprep.subr.bf16.mxu0 0
      %600 = vmatpush1.bf16.msra.mxu0 0
      %601 = vmatprep.subr.bf16.mxu0 0
      %602 = vmatpush1.bf16.msra.mxu0 0
      %603 = vmatprep.subr.bf16.mxu0 0
      %604 = vmatpush1.bf16.msra.mxu0 0
      %605 = vmatprep.subr.bf16.mxu0 0
      %606 = vmatpush1.bf16.msra.mxu0 0
      %607 = vmatprep.subr.bf16.mxu0 0
      %608 = vmatpush1.bf16.msra.mxu0 0
      %609 = vmatprep.subr.bf16.mxu0 0
      %610 = vmatpush1.bf16.msra.mxu0 0
      %611 = vmatprep.mubr.bf16.mxu0 0
      %612 = vmatmul.mubr.bf16.gmra.mrb[0].mxu0 %v573
      %v613 = vpop.f32.mrb[0].mxu0
      %v614 = vadd.f32 0.0, %v613
      %v615 = vpop.f32.mrb[0].mxu0
      %v616 = vpop.f32.mrb[0].mxu0
      %v617 = vpop.f32.mrb[0].mxu0
      %618 = vdwg.mxu0
      %619 = vrot.lane.b32.xlu0 %v506, 120
      %v620 = vpop.permute.xlu0 %619
      %621 = vrot.lane.b32.xlu0 %v506, 88
      %v622 = vpop.permute.xlu0 %621
      %v624 = vsel %vm510, %v620, 0
      %v627 = vsel %vm510, %v622, 0
      %629 = vmatprep.subr.bf16.mxu0 0
      %630 = vmatpush1.bf16.xpose.msra.mxu0 %v627
      %631 = vmatprep.subr.bf16.mxu0 0
      %632 = vmatpush1.bf16.xpose.msra.mxu0 0
      %633 = vmatprep.subr.bf16.mxu0 0
      %634 = vmatpush1.bf16.xpose.msra.mxu0 0
      %635 = vmatprep.subr.bf16.mxu0 0
      %636 = vmatpush1.bf16.xpose.msra.mxu0 0
      %637 = vmatprep.subr.bf16.mxu0 0
      %638 = vmatpush1.bf16.xpose.msra.mxu0 0
      %639 = vmatprep.subr.bf16.mxu0 0
      %640 = vmatpush1.bf16.xpose.msra.mxu0 0
      %641 = vmatprep.subr.bf16.mxu0 0
      %642 = vmatpush1.bf16.xpose.msra.mxu0 0
      %643 = vmatprep.subr.bf16.mxu0 0
      %644 = vmatpush1.bf16.xpose.msra.mxu0 0
      %645 = vmatprep.subr.bf16.mxu0 0
      %646 = vmatpush1.bf16.xpose.msra.mxu0 0
      %647 = vmatprep.subr.bf16.mxu0 0
      %648 = vmatpush1.bf16.xpose.msra.mxu0 0
      %649 = vmatprep.subr.bf16.mxu0 0
      %650 = vmatpush1.bf16.xpose.msra.mxu0 0
      %651 = vmatprep.subr.bf16.mxu0 0
      %652 = vmatpush1.bf16.xpose.msra.mxu0 0
      %653 = vmatprep.subr.bf16.mxu0 0
      %654 = vmatpush1.bf16.xpose.msra.mxu0 0
      %655 = vmatprep.subr.bf16.mxu0 0
      %656 = vmatpush1.bf16.xpose.msra.mxu0 0
      %657 = vmatprep.subr.bf16.mxu0 0
      %658 = vmatpush1.bf16.xpose.msra.mxu0 0
      %659 = vmatprep.subr.bf16.mxu0 0
      %660 = vmatpush1.bf16.xpose.msra.mxu0 0
      %661 = vmatprep.mubr.bf16.mxu0 0
      %662 = vmatmul.mubr.bf16.gmra.mrb[0].mxu0 %v624
      %v663 = vpop.f32.mrb[0].mxu0
      %v664 = vadd.f32 0.0, %v663
      %v665 = vpop.f32.mrb[0].mxu0
      %v666 = vpop.f32.mrb[0].mxu0
      %v667 = vpop.f32.mrb[0].mxu0
      %668 = vdwg.mxu0
      %v669 = vmul.f32 %v664, 0.35355338
      %v670 = vsel %vm510, %v669, -inf
      %671 = vmax.xlane.f32.xlu0 %v670
      %v672 = vpop.xlane.xlu0 %671
      %v673 = vsub.f32 %v669, %v672
      %v674 = vmul.f32 %v673, 1.442695
      %v675 = vpow.pop %v674
      %v676 = vsel %vm510, %v675, 0.0
      %677 = vadd.xlane.f32.xlu0 %v676
      %v678 = vpop.xlane.xlu0 %677
      %v679 = vrcp.pop %v678
      %v680 = vmul.f32 %v675, %v679
      %v681 = vpack.c.bf16 %v680, %v680
      %682 = vrot.lane.b32.xlu0 %v506, 56
      %v683 = vpop.permute.xlu0 %682
      %v685 = vsel %vm510, %v681, 0
      %v688 = vsel %vm575, %v683, 0
      %690 = vmatprep.subr.bf16.mxu0 0
      %691 = vmatpush1.bf16.msra.mxu0 %v688
      %692 = vmatprep.subr.bf16.mxu0 0
      %693 = vmatpush1.bf16.msra.mxu0 0
      %694 = vmatprep.subr.bf16.mxu0 0
      %695 = vmatpush1.bf16.msra.mxu0 0
      %696 = vmatprep.subr.bf16.mxu0 0
      %697 = vmatpush1.bf16.msra.mxu0 0
      %698 = vmatprep.subr.bf16.mxu0 0
      %699 = vmatpush1.bf16.msra.mxu0 0
      %700 = vmatprep.subr.bf16.mxu0 0
      %701 = vmatpush1.bf16.msra.mxu0 0
      %702 = vmatprep.subr.bf16.mxu0 0
      %703 = vmatpush1.bf16.msra.mxu0 0
      %704 = vmatprep.subr.bf16.mxu0 0
      %705 = vmatpush1.bf16.msra.mxu0 0
      %706 = vmatprep.subr.bf16.mxu0 0
      %707 = vmatpush1.bf16.msra.mxu0 0
      %708 = vmatprep.subr.bf16.mxu0 0
      %709 = vmatpush1.bf16.msra.mxu0 0
      %710 = vmatprep.subr.bf16.mxu0 0
      %711 = vmatpush1.bf16.msra.mxu0 0
      %712 = vmatprep.subr.bf16.mxu0 0
      %713 = vmatpush1.bf16.msra.mxu0 0
      %714 = vmatprep.subr.bf16.mxu0 0
      %715 = vmatpush1.bf16.msra.mxu0 0
      %716 = vmatprep.subr.bf16.mxu0 0
      %717 = vmatpush1.bf16.msra.mxu0 0
      %718 = vmatprep.subr.bf16.mxu0 0
      %719 = vmatpush1.bf16.msra.mxu0 0
      %720 = vmatprep.subr.bf16.mxu0 0
      %721 = vmatpush1.bf16.msra.mxu0 0
      %722 = vmatprep.mubr.bf16.mxu0 0
      %723 = vmatmul.mubr.bf16.gmra.mrb[0].mxu0 %v685
      %v724 = vpop.f32.mrb[0].mxu0
      %v725 = vadd.f32 0.0, %v724
      %v726 = vpop.f32.mrb[0].mxu0
      %v727 = vpop.f32.mrb[0].mxu0
      %v728 = vpop.f32.mrb[0].mxu0
      %729 = vdwg.mxu0
      %730 = vrot.lane.b32.xlu0 %v506, 112
      %v731 = vpop.permute.xlu0 %730
      %732 = vrot.lane.b32.xlu0 %v506, 80
      %v733 = vpop.permute.xlu0 %732
      %v735 = vsel %vm510, %v731, 0
      %v738 = vsel %vm510, %v733, 0
      %740 = vmatprep.subr.bf16.mxu0 0
      %741 = vmatpush1.bf16.xpose.msra.mxu0 %v738
      %742 = vmatprep.subr.bf16.mxu0 0
      %743 = vmatpush1.bf16.xpose.msra.mxu0 0
      %744 = vmatprep.subr.bf16.mxu0 0
      %745 = vmatpush1.bf16.xpose.msra.mxu0 0
      %746 = vmatprep.subr.bf16.mxu0 0
      %747 = vmatpush1.bf16.xpose.msra.mxu0 0
      %748 = vmatprep.subr.bf16.mxu0 0
      %749 = vmatpush1.bf16.xpose.msra.mxu0 0
      %750 = vmatprep.subr.bf16.mxu0 0
      %751 = vmatpush1.bf16.xpose.msra.mxu0 0
      %752 = vmatprep.subr.bf16.mxu0 0
      %753 = vmatpush1.bf16.xpose.msra.mxu0 0
      %754 = vmatprep.subr.bf16.mxu0 0
      %755 = vmatpush1.bf16.xpose.msra.mxu0 0
      %756 = vmatprep.subr.bf16.mxu0 0
      %757 = vmatpush1.bf16.xpose.msra.mxu0 0
      %758 = vmatprep.subr.bf16.mxu0 0
      %759 = vmatpush1.bf16.xpose.msra.mxu0 0
      %760 = vmatprep.subr.bf16.mxu0 0
      %761 = vmatpush1.bf16.xpose.msra.mxu0 0
      %762 = vmatprep.subr.bf16.mxu0 0
      %763 = vmatpush1.bf16.xpose.msra.mxu0 0
      %764 = vmatprep.subr.bf16.mxu0 0
      %765 = vmatpush1.bf16.xpose.msra.mxu0 0
      %766 = vmatprep.subr.bf16.mxu0 0
      %767 = vmatpush1.bf16.xpose.msra.mxu0 0
      %768 = vmatprep.subr.bf16.mxu0 0
      %769 = vmatpush1.bf16.xpose.msra.mxu0 0
      %770 = vmatprep.subr.bf16.mxu0 0
      %771 = vmatpush1.bf16.xpose.msra.mxu0 0
      %772 = vmatprep.mubr.bf16.mxu0 0
      %773 = vmatmul.mubr.bf16.gmra.mrb[0].mxu0 %v735
      %v774 = vpop.f32.mrb[0].mxu0
      %v775 = vadd.f32 0.0, %v774
      %v776 = vpop.f32.mrb[0].mxu0
      %v777 = vpop.f32.mrb[0].mxu0
      %v778 = vpop.f32.mrb[0].mxu0
      %779 = vdwg.mxu0
      %v780 = vmul.f32 %v775, 0.35355338
      %v781 = vsel %vm510, %v780, -inf
      %782 = vmax.xlane.f32.xlu0 %v781
      %v783 = vpop.xlane.xlu0 %782
      %v784 = vsub.f32 %v780, %v783
      %v785 = vmul.f32 %v784, 1.442695
      %v786 = vpow.pop %v785
      %v787 = vsel %vm510, %v786, 0.0
      %788 = vadd.xlane.f32.xlu0 %v787
      %v789 = vpop.xlane.xlu0 %788
      %v790 = vrcp.pop %v789
      %v791 = vmul.f32 %v786, %v790
      %v792 = vpack.c.bf16 %v791, %v791
      %793 = vrot.lane.b32.xlu0 %v506, 48
      %v794 = vpop.permute.xlu0 %793
      %v796 = vsel %vm510, %v792, 0
      %v799 = vsel %vm575, %v794, 0
      %801 = vmatprep.subr.bf16.mxu0 0
      %802 = vmatpush1.bf16.msra.mxu0 %v799
      %803 = vmatprep.subr.bf16.mxu0 0
      %804 = vmatpush1.bf16.msra.mxu0 0
      %805 = vmatprep.subr.bf16.mxu0 0
      %806 = vmatpush1.bf16.msra.mxu0 0
      %807 = vmatprep.subr.bf16.mxu0 0
      %808 = vmatpush1.bf16.msra.mxu0 0
      %809 = vmatprep.subr.bf16.mxu0 0
      %810 = vmatpush1.bf16.msra.mxu0 0
      %811 = vmatprep.subr.bf16.mxu0 0
      %812 = vmatpush1.bf16.msra.mxu0 0
      %813 = vmatprep.subr.bf16.mxu0 0
      %814 = vmatpush1.bf16.msra.mxu0 0
      %815 = vmatprep.subr.bf16.mxu0 0
      %816 = vmatpush1.bf16.msra.mxu0 0
      %817 = vmatprep.subr.bf16.mxu0 0
      %818 = vmatpush1.bf16.msra.mxu0 0
      %819 = vmatprep.subr.bf16.mxu0 0
      %820 = vmatpush1.bf16.msra.mxu0 0
      %821 = vmatprep.subr.bf16.mxu0 0
      %822 = vmatpush1.bf16.msra.mxu0 0
      %823 = vmatprep.subr.bf16.mxu0 0
      %824 = vmatpush1.bf16.msra.mxu0 0
      %825 = vmatprep.subr.bf16.mxu0 0
      %826 = vmatpush1.bf16.msra.mxu0 0
      %827 = vmatprep.subr.bf16.mxu0 0
      %828 = vmatpush1.bf16.msra.mxu0 0
      %829 = vmatprep.subr.bf16.mxu0 0
      %830 = vmatpush1.bf16.msra.mxu0 0
      %831 = vmatprep.subr.bf16.mxu0 0
      %832 = vmatpush1.bf16.msra.mxu0 0
      %833 = vmatprep.mubr.bf16.mxu0 0
      %834 = vmatmul.mubr.bf16.gmra.mrb[0].mxu0 %v796
      %v835 = vpop.f32.mrb[0].mxu0
      %v836 = vadd.f32 0.0, %v835
      %v837 = vpop.f32.mrb[0].mxu0
      %v838 = vpop.f32.mrb[0].mxu0
      %v839 = vpop.f32.mrb[0].mxu0
      %840 = vdwg.mxu0
      %841 = vrot.lane.b32.xlu0 %v506, 104
      %v842 = vpop.permute.xlu0 %841
      %843 = vrot.lane.b32.xlu0 %v506, 72
      %v844 = vpop.permute.xlu0 %843
      %v846 = vsel %vm510, %v842, 0
      %v849 = vsel %vm510, %v844, 0
      %851 = vmatprep.subr.bf16.mxu0 0
      %852 = vmatpush1.bf16.xpose.msra.mxu0 %v849
      %853 = vmatprep.subr.bf16.mxu0 0
      %854 = vmatpush1.bf16.xpose.msra.mxu0 0
      %855 = vmatprep.subr.bf16.mxu0 0
      %856 = vmatpush1.bf16.xpose.msra.mxu0 0
      %857 = vmatprep.subr.bf16.mxu0 0
      %858 = vmatpush1.bf16.xpose.msra.mxu0 0
      %859 = vmatprep.subr.bf16.mxu0 0
      %860 = vmatpush1.bf16.xpose.msra.mxu0 0
      %861 = vmatprep.subr.bf16.mxu0 0
      %862 = vmatpush1.bf16.xpose.msra.mxu0 0
      %863 = vmatprep.subr.bf16.mxu0 0
      %864 = vmatpush1.bf16.xpose.msra.mxu0 0
      %865 = vmatprep.subr.bf16.mxu0 0
      %866 = vmatpush1.bf16.xpose.msra.mxu0 0
      %867 = vmatprep.subr.bf16.mxu0 0
      %868 = vmatpush1.bf16.xpose.msra.mxu0 0
      %869 = vmatprep.subr.bf16.mxu0 0
      %870 = vmatpush1.bf16.xpose.msra.mxu0 0
      %871 = vmatprep.subr.bf16.mxu0 0
      %872 = vmatpush1.bf16.xpose.msra.mxu0 0
      %873 = vmatprep.subr.bf16.mxu0 0
      %874 = vmatpush1.bf16.xpose.msra.mxu0 0
      %875 = vmatprep.subr.bf16.mxu0 0
      %876 = vmatpush1.bf16.xpose.msra.mxu0 0
      %877 = vmatprep.subr.bf16.mxu0 0
      %878 = vmatpush1.bf16.xpose.msra.mxu0 0
      %879 = vmatprep.subr.bf16.mxu0 0
      %880 = vmatpush1.bf16.xpose.msra.mxu0 0
      %881 = vmatprep.subr.bf16.mxu0 0
      %882 = vmatpush1.bf16.xpose.msra.mxu0 0
      %883 = vmatprep.mubr.bf16.mxu0 0
      %884 = vmatmul.mubr.bf16.gmra.mrb[0].mxu0 %v846
      %v885 = vpop.f32.mrb[0].mxu0
      %v886 = vadd.f32 0.0, %v885
      %v887 = vpop.f32.mrb[0].mxu0
      %v888 = vpop.f32.mrb[0].mxu0
      %v889 = vpop.f32.mrb[0].mxu0
      %890 = vdwg.mxu0
      %v891 = vmul.f32 %v886, 0.35355338
      %v892 = vsel %vm510, %v891, -inf
      %893 = vmax.xlane.f32.xlu0 %v892
      %v894 = vpop.xlane.xlu0 %893
      %v895 = vsub.f32 %v891, %v894
      %v896 = vmul.f32 %v895, 1.442695
      %v897 = vpow.pop %v896
      %v898 = vsel %vm510, %v897, 0.0
      %899 = vadd.xlane.f32.xlu0 %v898
      %v900 = vpop.xlane.xlu0 %899
      %v901 = vrcp.pop %v900
      %v902 = vmul.f32 %v897, %v901
      %v903 = vpack.c.bf16 %v902, %v902
      %904 = vrot.lane.b32.xlu0 %v506, 40
      %v905 = vpop.permute.xlu0 %904
      %v907 = vsel %vm510, %v903, 0
      %v910 = vsel %vm575, %v905, 0
      %912 = vmatprep.subr.bf16.mxu0 0
      %913 = vmatpush1.bf16.msra.mxu0 %v910
      %914 = vmatprep.subr.bf16.mxu0 0
      %915 = vmatpush1.bf16.msra.mxu0 0
      %916 = vmatprep.subr.bf16.mxu0 0
      %917 = vmatpush1.bf16.msra.mxu0 0
      %918 = vmatprep.subr.bf16.mxu0 0
      %919 = vmatpush1.bf16.msra.mxu0 0
      %920 = vmatprep.subr.bf16.mxu0 0
      %921 = vmatpush1.bf16.msra.mxu0 0
      %922 = vmatprep.subr.bf16.mxu0 0
      %923 = vmatpush1.bf16.msra.mxu0 0
      %924 = vmatprep.subr.bf16.mxu0 0
      %925 = vmatpush1.bf16.msra.mxu0 0
      %926 = vmatprep.subr.bf16.mxu0 0
      %927 = vmatpush1.bf16.msra.mxu0 0
      %928 = vmatprep.subr.bf16.mxu0 0
      %929 = vmatpush1.bf16.msra.mxu0 0
      %930 = vmatprep.subr.bf16.mxu0 0
      %931 = vmatpush1.bf16.msra.mxu0 0
      %932 = vmatprep.subr.bf16.mxu0 0
      %933 = vmatpush1.bf16.msra.mxu0 0
      %934 = vmatprep.subr.bf16.mxu0 0
      %935 = vmatpush1.bf16.msra.mxu0 0
      %936 = vmatprep.subr.bf16.mxu0 0
      %937 = vmatpush1.bf16.msra.mxu0 0
      %938 = vmatprep.subr.bf16.mxu0 0
      %939 = vmatpush1.bf16.msra.mxu0 0
      %940 = vmatprep.subr.bf16.mxu0 0
      %941 = vmatpush1.bf16.msra.mxu0 0
      %942 = vmatprep.subr.bf16.mxu0 0
      %943 = vmatpush1.bf16.msra.mxu0 0
      %944 = vmatprep.mubr.bf16.mxu0 0
      %945 = vmatmul.mubr.bf16.gmra.mrb[0].mxu0 %v907
      %v946 = vpop.f32.mrb[0].mxu0
      %v947 = vadd.f32 0.0, %v946
      %v948 = vpop.f32.mrb[0].mxu0
      %v949 = vpop.f32.mrb[0].mxu0
      %v950 = vpop.f32.mrb[0].mxu0
      %951 = vdwg.mxu0
      %953 = vrot.lane.b32.xlu0 %v725, 8
      %v954 = vpop.permute.xlu0 %953
      %957 = vrot.lane.b32.xlu0 %v836, 16
      %v958 = vpop.permute.xlu0 %957
      %961 = vrot.lane.b32.xlu0 %v947, 24
      %v962 = vpop.permute.xlu0 %961
      %v964 = vsel %vm510, %v614, %v954
      %vm965 = vcmask 130048
      %v966 = vsel %vm965, %v964, %v958
      %vm967 = vcmask 195584
      %v968 = vsel %vm967, %v966, %v962
      %v969 = vpack.c.bf16 %v968, %v968
      %v970 = vld [vmem:[%s3] sm:$0xf]
      %v971 = vld [vmem:[%s3 + $0x4] sm:$0xf]
      %v972 = vld [vmem:[%s3 + $0x8] sm:$0xf]
      %v973 = vld [vmem:[%s3 + $0xc] sm:$0xf]
      %v974 = vld [vmem:[%s4] sm:$0x1]
      %v976 = vlaneseq
      %v977 = vshrl.u32 %v976, 7
      %v978 = vsub.s32 0, %v977
      %v979 = vrot.slane %v974, %v978
      %v985 = vunpack.c.l.b16 %v970
      %v986 = vunpack.c.l.b16 %v971
      %v987 = vunpack.c.l.b16 %v972
      %v988 = vunpack.c.l.b16 %v973
      %v989 = vpack.c.b16 %v986, %v985
      %v990 = vpack.c.b16 %v988, %v987
      %v994 = vsel %vm462, %v969, 0
      %996 = vmatprep.subr.bf16.mxu0 0
      %997 = vmatpush1.bf16.msra.mxu0 %v989
      %998 = vmatprep.subr.bf16.mxu0 0
      %999 = vmatpush1.bf16.msra.mxu0 %v990
      %1000 = vmatprep.subr.bf16.mxu0 0
      %1001 = vmatpush1.bf16.msra.mxu0 0
      %1002 = vmatprep.subr.bf16.mxu0 0
      %1003 = vmatpush1.bf16.msra.mxu0 0
      %1004 = vmatprep.subr.bf16.mxu0 0
      %1005 = vmatpush1.bf16.msra.mxu0 0
      %1006 = vmatprep.subr.bf16.mxu0 0
      %1007 = vmatpush1.bf16.msra.mxu0 0
      %1008 = vmatprep.subr.bf16.mxu0 0
      %1009 = vmatpush1.bf16.msra.mxu0 0
      %1010 = vmatprep.subr.bf16.mxu0 0
      %1011 = vmatpush1.bf16.msra.mxu0 0
      %1012 = vmatprep.subr.bf16.mxu0 0
      %1013 = vmatpush1.bf16.msra.mxu0 0
      %1014 = vmatprep.subr.bf16.mxu0 0
      %1015 = vmatpush1.bf16.msra.mxu0 0
      %1016 = vmatprep.subr.bf16.mxu0 0
      %1017 = vmatpush1.bf16.msra.mxu0 0
      %1018 = vmatprep.subr.bf16.mxu0 0
      %1019 = vmatpush1.bf16.msra.mxu0 0
      %1020 = vmatprep.subr.bf16.mxu0 0
      %1021 = vmatpush1.bf16.msra.mxu0 0
      %1022 = vmatprep.subr.bf16.mxu0 0
      %1023 = vmatpush1.bf16.msra.mxu0 0
      %1024 = vmatprep.subr.bf16.mxu0 0
      %1025 = vmatpush1.bf16.msra.mxu0 0
      %1026 = vmatprep.subr.bf16.mxu0 0
      %1027 = vmatpush1.bf16.msra.mxu0 0
      %1028 = vmatprep.mubr.bf16.mxu0 0
      %1029 = vmatmul.mubr.bf16.gmra.mrb[0].mxu0 %v994
      %v1030 = vpop.f32.mrb[0].mxu0
      %v1031 = vadd.f32 %v979, %v1030
      %v1032 = vpop.f32.mrb[0].mxu0
      %v1033 = vpop.f32.mrb[0].mxu0
      %v1034 = vpop.f32.mrb[0].mxu0
      %1035 = vdwg.mxu0
      %v1036 = vadd.f32 %v438, %v1031
      %v1037 = vsel %vm462, %v1036, 0.0
      %1038 = vadd.xlane.f32.xlu0 %v1037
      %v1039 = vpop.xlane.xlu0 %1038
      %v1040 = vrcp.pop 32.0
      %v1041 = vmul.f32 %v1039, %v1040
      %v1042 = vsub.f32 %v1036, %v1041
      %v1043 = vmul.f32 %v1042, %v1042
      %v1044 = vsel %vm462, %v1043, 0.0
      %1045 = vadd.xlane.f32.xlu0 %v1044
      %v1046 = vpop.xlane.xlu0 %1045
      %v1047 = vmul.f32 %v1046, %v1040
      %v1048 = vadd.f32 %v1047, 1e-05
      %v1049 = vrsqrt.pop %v1048
      %v1050 = vmul.f32 %v1042, %v1049
      %v1051 = vld [vmem:[%s5] sm:$0x1]
      %v1053 = vlaneseq
      %v1054 = vshrl.u32 %v1053, 7
      %v1055 = vsub.s32 0, %v1054
      %v1056 = vrot.slane %v1051, %v1055
      %v1058 = vmul.f32 %v1050, %v1056
      %v1059 = vld [vmem:[%s6] sm:$0x1]
      %v1061 = vlaneseq
      %v1062 = vshrl.u32 %v1061, 7
      %v1063 = vsub.s32 0, %v1062
      %v1064 = vrot.slane %v1059, %v1063
      %v1066 = vadd.f32 %v1058, %v1064
      %v1067 = vpack.c.bf16 %v1066, %v1066
      %v1068 = vld [vmem:[%s7] sm:$0xf]
      %v1069 = vld [vmem:[%s7 + $0x4] sm:$0xf]
      %v1070 = vld [vmem:[%s7 + $0x8] sm:$0xf]
      %v1071 = vld [vmem:[%s7 + $0xc] sm:$0xf]
      %v1072 = vld [vmem:[%s8] sm:$0x1]
      %v1074 = vlaneseq
      %v1075 = vshrl.u32 %v1074, 7
      %v1076 = vsub.s32 0, %v1075
      %v1077 = vrot.slane %v1072, %v1076
      %v1083 = vunpack.c.l.b16 %v1068
      %v1084 = vunpack.c.l.b16 %v1069
      %v1085 = vunpack.c.l.b16 %v1070
      %v1086 = vunpack.c.l.b16 %v1071
      %v1087 = vpack.c.b16 %v1084, %v1083
      %v1088 = vpack.c.b16 %v1086, %v1085
      %v1092 = vsel %vm462, %v1067, 0
      %1094 = vmatprep.subr.bf16.mxu0 0
      %1095 = vmatpush1.bf16.msra.mxu0 %v1087
      %1096 = vmatprep.subr.bf16.mxu0 0
      %1097 = vmatpush1.bf16.msra.mxu0 %v1088
      %1098 = vmatprep.subr.bf16.mxu0 0
      %1099 = vmatpush1.bf16.msra.mxu0 0
      %1100 = vmatprep.subr.bf16.mxu0 0
      %1101 = vmatpush1.bf16.msra.mxu0 0
      %1102 = vmatprep.subr.bf16.mxu0 0
      %1103 = vmatpush1.bf16.msra.mxu0 0
      %1104 = vmatprep.subr.bf16.mxu0 0
      %1105 = vmatpush1.bf16.msra.mxu0 0
      %1106 = vmatprep.subr.bf16.mxu0 0
      %1107 = vmatpush1.bf16.msra.mxu0 0
      %1108 = vmatprep.subr.bf16.mxu0 0
      %1109 = vmatpush1.bf16.msra.mxu0 0
      %1110 = vmatprep.subr.bf16.mxu0 0
      %1111 = vmatpush1.bf16.msra.mxu0 0
      %1112 = vmatprep.subr.bf16.mxu0 0
      %1113 = vmatpush1.bf16.msra.mxu0 0
      %1114 = vmatprep.subr.bf16.mxu0 0
      %1115 = vmatpush1.bf16.msra.mxu0 0
      %1116 = vmatprep.subr.bf16.mxu0 0
      %1117 = vmatpush1.bf16.msra.mxu0 0
      %1118 = vmatprep.subr.bf16.mxu0 0
      %1119 = vmatpush1.bf16.msra.mxu0 0
      %1120 = vmatprep.subr.bf16.mxu0 0
      %1121 = vmatpush1.bf16.msra.mxu0 0
      %1122 = vmatprep.subr.bf16.mxu0 0
      %1123 = vmatpush1.bf16.msra.mxu0 0
      %1124 = vmatprep.subr.bf16.mxu0 0
      %1125 = vmatpush1.bf16.msra.mxu0 0
      %1126 = vmatprep.mubr.bf16.mxu0 0
      %1127 = vmatmul.mubr.bf16.gmra.mrb[0].mxu0 %v1092
      %v1128 = vpop.f32.mrb[0].mxu0
      %v1129 = vadd.f32 %v1077, %v1128
      %v1130 = vpop.f32.mrb[0].mxu0
      %v1131 = vpop.f32.mrb[0].mxu0
      %v1132 = vpop.f32.mrb[0].mxu0
      %1133 = vdwg.mxu0
      %v1134 = vmax.f32 %v1129, 0.0
      %v1135 = vpack.c.bf16 %v1134, %v1134
      %v1136 = vld [vmem:[%s9] sm:$0xf]
      %v1137 = vld [vmem:[%s9 + $0x4] sm:$0xf]
      %v1138 = vld [vmem:[%s9 + $0x8] sm:$0xf]
      %v1139 = vld [vmem:[%s9 + $0xc] sm:$0xf]
      %v1140 = vld [vmem:[%s10] sm:$0x1]
      %v1142 = vlaneseq
      %v1143 = vshrl.u32 %v1142, 7
      %v1144 = vsub.s32 0, %v1143
      %v1145 = vrot.slane %v1140, %v1144
      %v1151 = vunpack.c.l.b16 %v1136
      %v1152 = vunpack.c.l.b16 %v1137
      %v1153 = vunpack.c.l.b16 %v1138
      %v1154 = vunpack.c.l.b16 %v1139
      %v1155 = vpack.c.b16 %v1152, %v1151
      %v1156 = vpack.c.b16 %v1154, %v1153
      %v1160 = vsel %vm462, %v1135, 0
      %1162 = vmatprep.subr.bf16.mxu0 0
      %1163 = vmatpush1.bf16.msra.mxu0 %v1155
      %1164 = vmatprep.subr.bf16.mxu0 0
      %1165 = vmatpush1.bf16.msra.mxu0 %v1156
      %1166 = vmatprep.subr.bf16.mxu0 0
      %1167 = vmatpush1.bf16.msra.mxu0 0
      %1168 = vmatprep.subr.bf16.mxu0 0
      %1169 = vmatpush1.bf16.msra.mxu0 0
      %1170 = vmatprep.subr.bf16.mxu0 0
      %1171 = vmatpush1.bf16.msra.mxu0 0
      %1172 = vmatprep.subr.bf16.mxu0 0
      %1173 = vmatpush1.bf16.msra.mxu0 0
      %1174 = vmatprep.subr.bf16.mxu0 0
      %1175 = vmatpush1.bf16.msra.mxu0 0
      %1176 = vmatprep.subr.bf16.mxu0 0
      %1177 = vmatpush1.bf16.msra.mxu0 0
      %1178 = vmatprep.subr.bf16.mxu0 0
      %1179 = vmatpush1.bf16.msra.mxu0 0
      %1180 = vmatprep.subr.bf16.mxu0 0
      %1181 = vmatpush1.bf16.msra.mxu0 0
      %1182 = vmatprep.subr.bf16.mxu0 0
      %1183 = vmatpush1.bf16.msra.mxu0 0
      %1184 = vmatprep.subr.bf16.mxu0 0
      %1185 = vmatpush1.bf16.msra.mxu0 0
      %1186 = vmatprep.subr.bf16.mxu0 0
      %1187 = vmatpush1.bf16.msra.mxu0 0
      %1188 = vmatprep.subr.bf16.mxu0 0
      %1189 = vmatpush1.bf16.msra.mxu0 0
      %1190 = vmatprep.subr.bf16.mxu0 0
      %1191 = vmatpush1.bf16.msra.mxu0 0
      %1192 = vmatprep.subr.bf16.mxu0 0
      %1193 = vmatpush1.bf16.msra.mxu0 0
      %1194 = vmatprep.mubr.bf16.mxu0 0
      %1195 = vmatmul.mubr.bf16.gmra.mrb[0].mxu0 %v1160
      %v1196 = vpop.f32.mrb[0].mxu0
      %v1197 = vadd.f32 %v1145, %v1196
      %v1198 = vpop.f32.mrb[0].mxu0
      %v1199 = vpop.f32.mrb[0].mxu0
      %v1200 = vpop.f32.mrb[0].mxu0
      %1201 = vdwg.mxu0
      %v1202 = vadd.f32 %v1066, %v1197
      %v1203 = vsel %vm462, %v1202, 0.0
      %1204 = vadd.xlane.f32.xlu0 %v1203
      %v1205 = vpop.xlane.xlu0 %1204
      %v1206 = vmul.f32 %v1205, %v1040
      %v1207 = vsub.f32 %v1202, %v1206
      %v1208 = vmul.f32 %v1207, %v1207
      %v1209 = vsel %vm462, %v1208, 0.0
      %1210 = vadd.xlane.f32.xlu0 %v1209
      %v1211 = vpop.xlane.xlu0 %1210
      %v1212 = vmul.f32 %v1211, %v1040
      %v1213 = vadd.f32 %v1212, 1e-05
      %v1214 = vrsqrt.pop %v1213
      %v1215 = vmul.f32 %v1207, %v1214
      %v1216 = vld [vmem:[%s11] sm:$0x1]
      %v1218 = vlaneseq
      %v1219 = vshrl.u32 %v1218, 7
      %v1220 = vsub.s32 0, %v1219
      %v1221 = vrot.slane %v1216, %v1220
      %v1223 = vmul.f32 %v1215, %v1221
      %v1224 = vld [vmem:[%s12] sm:$0x1]
      %v1226 = vlaneseq
      %v1227 = vshrl.u32 %v1226, 7
      %v1228 = vsub.s32 0, %v1227
      %v1229 = vrot.slane %v1224, %v1228
      %v1231 = vadd.f32 %v1223, %v1229
      %v1232 = vpack.c.bf16 %v1231, %v1231
      %vm1233 = vcmask 257024
      %1234 = vst.msk [vmem:[%s435] sm:$0xf] %vm1233, %v1232
      %p1235 = scmp.lt.s32.totalorder %s24, 1
      %s1236 = scalar_select %p1235, %s24, 1
      %s1237 = smul.addr %s1236, 4
      %s1238 = scalar_lea.vmem %s13, %s1237
      // Predicated region
      $region73: #{transformer_forward.5} parent=71 // pred_check
        %p1239 = pneg %p320
      $region74: #{transformer_forward.5} parent=71 // pred_check_branch
        %1241 = sbr.rel (%p1239) target = $region76
      $region75: #{transformer_forward.5} parent=71 // pred_region
        _
      $region76: #{transformer_forward.5} parent=71 // pred_fallthru
        _
    $region72: #{transformer_forward.5} parent=5 // pred_fallthru
      _
    %p1242 = scmp.le.s32.totalorder 2, %s19
    // Predicated region
    $region77: #{transformer_forward.5} parent=5 // pred_check
      %p1243 = pneg %p1242
    $region78: #{transformer_forward.5} parent=5 // pred_check_branch
      %1245 = sbr.rel (%p1243) target = $region80
    $region79: #{transformer_forward.5} parent=5 // pred_region
      %s1246 = ssub.s32 %s19, 2
      // Predicated region
      $region81: #{transformer_forward.5} parent=79 // pred_check
        %p1247 = pneg %p326
      $region82: #{transformer_forward.5} parent=79 // pred_check_branch
        %1249 = sbr.rel (%p1247) target = $region84
      $region83: #{transformer_forward.5} parent=79 // pred_region
        %p1250 = scmp.lt.s32.totalorder %s25, 1
        %s1251 = scalar_select %p1250, %s25, 1
        %s1252 = smul.addr %s1251, 4
        %s1253 = scalar_lea.vmem %s13, %s1252
      $region84: #{transformer_forward.5} parent=79 // pred_fallthru
        _
    $region80: #{transformer_forward.5} parent=5 // pred_fallthru
      _
  $region6: #{transformer_forward.5} parent=0 // loop_footer
    %s23 = sadd.s32 1, %s19
  $region7: #{transformer_forward.5} parent=0 // loop_footer_branch
    %18 = sbr.rel target = $region3
  $region8: #{transformer_forward.5} parent=0 // loop_exit
    _

</llo_original>
